<compile_context>
chip_gen: v5e
topology: v5e:2x2
jax: 0.10.0
libtpu: 0.0.40
codegen_flags: <defaults>
</compile_context>

<pallas_src>
import math

import jax
import jax.numpy as jnp
import numpy as np
from jax import lax
from jax.experimental import pallas as pl
from jax.experimental.pallas import tpu as pltpu

PROTEIN, MOLECULE, TEXT = "protein", "molecule", "text"
D_TYPES = (PROTEIN, MOLECULE, TEXT)

EMB_DIM = 64
NUM_HEADS = 2
HEAD_DIM = EMB_DIM // NUM_HEADS
FF_DIM = EMB_DIM * 2
LN_EPS = 1e-5
NEG_INF = -1e9  # additive bias for masked keys (exp underflows to exactly 0)
                # NOTE: a fully-padded sequence softmaxes to garbage instead of PyTorch's NaN.


# ---------------------------------------------------------------------------
# Fused Pallas kernel
# ---------------------------------------------------------------------------

def _layer_norm(x, g, b):
    mu = jnp.mean(x, axis=-1, keepdims=True)
    var = jnp.mean((x - mu) ** 2, axis=-1, keepdims=True)
    return (x - mu) * lax.rsqrt(var + LN_EPS) * g + b


def _encoder_layer(x, bias, attn_scratch,
                   wqkv_ref, bqkv_ref, wo_ref, bo_ref, ln1g_ref, ln1b_ref,
                   w1_ref, b1_ref, w2_ref, b2_ref, ln2g_ref, ln2b_ref):
    # x: (M, E) f32 slab of B_t batch elements; bias: (M, M) additive attention bias
    # (block-diagonal cross-batch masking + key-padding); weights pre-transposed (in, out).
    qkv = jnp.dot(x, wqkv_ref[...], preferred_element_type=jnp.float32) + bqkv_ref[...]
    q = qkv[:, 0:EMB_DIM]
    k = qkv[:, EMB_DIM:2 * EMB_DIM]
    v = qkv[:, 2 * EMB_DIM:3 * EMB_DIM]

    scale = 1.0 / math.sqrt(HEAD_DIM)
    for h in range(NUM_HEADS):                       # static unroll: 2 heads only
        c0 = h * HEAD_DIM
        qh = q[:, c0:c0 + HEAD_DIM]
        kh = k[:, c0:c0 + HEAD_DIM]
        vh = v[:, c0:c0 + HEAD_DIM]
        s = lax.dot_general(qh, kh, (((1,), (1,)), ((), ())),
                            preferred_element_type=jnp.float32) * scale + bias
        s = s - jnp.max(s, axis=-1, keepdims=True)
        p = jnp.exp(s)
        p = p * pl.reciprocal(jnp.sum(p, axis=-1, keepdims=True), approx=True)
        # write head output straight into the (M, E) scratch (no lane concat)
        attn_scratch[:, c0:c0 + HEAD_DIM] = jnp.dot(
            p, vh, preferred_element_type=jnp.float32)

    attn = jnp.dot(attn_scratch[...], wo_ref[...],
                   preferred_element_type=jnp.float32) + bo_ref[...]
    y = _layer_norm(x + attn, ln1g_ref[...], ln1b_ref[...])          # post-norm #1
    ff = jnp.maximum(
        jnp.dot(y, w1_ref[...], preferred_element_type=jnp.float32) + b1_ref[...], 0.0)
    ff = jnp.dot(ff, w2_ref[...], preferred_element_type=jnp.float32) + b2_ref[...]
    return _layer_norm(y + ff, ln2g_ref[...], ln2b_ref[...])         # post-norm #2


def fused_forward_kernel(
    # inputs
    x_ref, mask_ref, kbias_ref, bdiag_ref, bpos_ref, wproj_ref, ppool_ref,
    l1_wqkv, l1_bqkv, l1_wo, l1_bo, l1_ln1g, l1_ln1b,
    l1_w1, l1_b1, l1_w2, l1_b2, l1_ln2g, l1_ln2b,
    l2_wqkv, l2_bqkv, l2_wo, l2_bo, l2_ln1g, l2_ln1b,
    l2_w1, l2_b1, l2_w2, l2_b2, l2_ln2g, l2_ln2b,
    lastw_ref, lastb_ref,
    # outputs
    h0_ref, h1_ref, h2_ref, out_ref,
    # scratch
    attn_scratch,
):
    # ---- fused modality projection: one (M, Dtot) @ (Dtot, E) matmul ----
    x = x_ref[...]
    h0 = jnp.dot(x, wproj_ref[...], preferred_element_type=jnp.float32) + bpos_ref[...]
    h0_ref[...] = h0

    # (M, M) additive attention bias shared by both layers
    bias = bdiag_ref[...] + kbias_ref[0]            # (M, M) + (1, M)

    # ---- transformer encoder layer 1 ----
    h1 = _encoder_layer(h0, bias, attn_scratch,
                        l1_wqkv, l1_bqkv, l1_wo, l1_bo, l1_ln1g, l1_ln1b,
                        l1_w1, l1_b1, l1_w2, l1_b2, l1_ln2g, l1_ln2b)
    h1_ref[...] = h1

    # ---- transformer encoder layer 2 ----
    h2 = _encoder_layer(h1, bias, attn_scratch,
                        l2_wqkv, l2_bqkv, l2_wo, l2_bo, l2_ln1g, l2_ln1b,
                        l2_w1, l2_b1, l2_w2, l2_b2, l2_ln2g, l2_ln2b)
    h2_ref[...] = h2

    # ---- masked mean-pool (block-diagonal pooling matmul) + output head ----
    m = mask_ref[...]                                      # (M, 1)
    pool = ppool_ref[...]                                  # (B_t, M)
    summed = jnp.dot(pool, h2 * m, preferred_element_type=jnp.float32)   # (B_t, E)
    count = jnp.dot(pool, m, preferred_element_type=jnp.float32)         # (B_t, 1)
    mean = summed / jnp.maximum(count, 1.0)                # clamp(min=1.0)
    out_ref[...] = jnp.dot(mean, lastw_ref[...],
                           preferred_element_type=jnp.float32) + lastb_ref[...]


# ---------------------------------------------------------------------------
# Host-side wrapper (weight fusion / pre-transpose + single pallas_call)
# ---------------------------------------------------------------------------

def _prep_layer(p):
    # pre-transpose everything to (in, out); fuse Q/K/V weights & biases
    return (
        jnp.concatenate([p["wq"].T, p["wk"].T, p["wv"].T], axis=1),   # (E, 3E)
        jnp.concatenate([p["bq"], p["bk"], p["bv"]], axis=1),         # (1, 3E)
        p["wo"].T, p["bo"], p["ln1_g"], p["ln1_b"],
        p["w1"].T, p["b1"], p["w2"].T, p["b2"], p["ln2_g"], p["ln2_b"],
    )


def _pick_batch_tile(B, L, target_rows=128):
    # largest divisor of B that keeps B_t*L near an MXU-friendly row count and
    # keeps the (B_t, out) output block layout-legal (B_t == B or multiple of 8).
    cands = [d for d in range(1, B + 1) if B % d == 0 and (d == B or d % 8 == 0)]
    good = [d for d in cands if d * L <= max(target_rows, L)]
    return max(good) if good else min(cands)


def forward(params, batch_data, batch_mask):
    # Zero-embed each modality's features into a shared Dtot feature space so the
    # block-concatenated (Dtot, E) weight projects every position in ONE matmul.
    dims = [batch_data[dt].shape[-1] for dt in D_TYPES]
    dtot = sum(dims)
    x_parts, m_parts, b_rows = [], [], []
    off = 0
    for dt, dk in zip(D_TYPES, dims):
        x = batch_data[dt].astype(jnp.float32)                        # (B, L_k, D_k)
        x_parts.append(jnp.pad(x, ((0, 0), (0, 0), (off, dtot - off - dk))))
        m_parts.append(batch_mask[dt].astype(jnp.float32))            # (B, L_k)
        b_rows.append(jnp.broadcast_to(params["proj"][dt][1][None, :],
                                       (x.shape[1], EMB_DIM)))
        off += dk

    x_all = jnp.concatenate(x_parts, axis=1)                          # (B, L, Dtot)
    mask2d = jnp.concatenate(m_parts, axis=1)                         # (B, L)
    b_pos = jnp.concatenate(b_rows, axis=0)                           # (L, E)
    B, L, _ = x_all.shape

    w_proj = jnp.concatenate([params["proj"][dt][0].T for dt in D_TYPES], axis=0)  # (Dtot,E)

    bt = _pick_batch_tile(B, L)
    n_tiles = B // bt
    M = bt * L

    x_flat = x_all.reshape(B * L, dtot)
    mask_flat = mask2d.reshape(B * L, 1)
    # key-padding bias row per grid tile: (n_tiles, 1, M)
    key_bias = jnp.where(mask2d == 0.0, NEG_INF, 0.0).astype(jnp.float32).reshape(
        n_tiles, 1, M)
    # constant block-diagonal cross-batch mask: 0 within a batch element, NEG_INF across
    block_diag = (jnp.kron(1.0 - jnp.eye(bt, dtype=jnp.float32),
                           jnp.ones((L, L), jnp.float32)) * NEG_INF)  # (M, M)
    bpos_tiled = jnp.tile(b_pos, (bt, 1))                             # (M, E)
    ppool = jnp.kron(jnp.eye(bt, dtype=jnp.float32),
                     jnp.ones((1, L), jnp.float32))                   # (bt, M)

    lw = _prep_layer(params["trans1"]) + _prep_layer(params["trans2"])
    last_w_t = params["last_w"].T                                     # (E, out)
    last_b = params["last_b"].reshape(1, -1)
    out_dim = last_w_t.shape[1]

    def const_spec(a):
        return pl.BlockSpec(a.shape, lambda i: (0,) * a.ndim)

    in_specs = (
        [pl.BlockSpec((M, dtot), lambda i: (i, 0)),
         pl.BlockSpec((M, 1), lambda i: (i, 0)),
         pl.BlockSpec((1, 1, M), lambda i: (i, 0, 0)),
         const_spec(block_diag), const_spec(bpos_tiled),
         const_spec(w_proj), const_spec(ppool)]
        + [const_spec(w) for w in lw]
        + [const_spec(last_w_t), const_spec(last_b)]
    )
    out_specs = (
        pl.BlockSpec((M, EMB_DIM), lambda i: (i, 0)),
        pl.BlockSpec((M, EMB_DIM), lambda i: (i, 0)),
        pl.BlockSpec((M, EMB_DIM), lambda i: (i, 0)),
        pl.BlockSpec((bt, out_dim), lambda i: (i, 0)),
    )
    out_shape = (
        jax.ShapeDtypeStruct((B * L, EMB_DIM), jnp.float32),
        jax.ShapeDtypeStruct((B * L, EMB_DIM), jnp.float32),
        jax.ShapeDtypeStruct((B * L, EMB_DIM), jnp.float32),
        jax.ShapeDtypeStruct((B, out_dim), jnp.float32),
    )

    h0, h1, h2, output = pl.pallas_call(
        fused_forward_kernel,
        out_shape=out_shape,
        grid_spec=pltpu.PrefetchScalarGridSpec(
            num_scalar_prefetch=0,
            grid=(n_tiles,),
            in_specs=in_specs,
            out_specs=out_specs,
            scratch_shapes=[pltpu.VMEM((M, EMB_DIM), jnp.float32)],
        ),
        compiler_params=pltpu.CompilerParams(dimension_semantics=("parallel",)),
    )(x_flat, mask_flat, key_bias, block_diag, bpos_tiled, w_proj, ppool,
      *lw, last_w_t, last_b)

    hidden_states = [h0.reshape(B, L, EMB_DIM),
                     h1.reshape(B, L, EMB_DIM),
                     h2.reshape(B, L, EMB_DIM)]
    # TODO(synk): a fully-padded batch element yields finite garbage here where PyTorch
    # would produce NaN (src_key_padding_mask all-True); no clean Pallas equivalent chosen.
    return output, hidden_states, mask2d[..., None]


# ---------------------------------------------------------------------------
# Parameter init (deterministic, synthetic — mirrors module __init__ shapes)
# ---------------------------------------------------------------------------

def _init_encoder_layer(key):
    ks = jax.random.split(key, 8)
    s = 0.05
    return {
        "wq": jax.random.normal(ks[0], (EMB_DIM, EMB_DIM), jnp.float32) * s,
        "bq": jnp.zeros((1, EMB_DIM), jnp.float32),
        "wk": jax.random.normal(ks[1], (EMB_DIM, EMB_DIM), jnp.float32) * s,
        "bk": jnp.zeros((1, EMB_DIM), jnp.float32),
        "wv": jax.random.normal(ks[2], (EMB_DIM, EMB_DIM), jnp.float32) * s,
        "bv": jnp.zeros((1, EMB_DIM), jnp.float32),
        "wo": jax.random.normal(ks[3], (EMB_DIM, EMB_DIM), jnp.float32) * s,
        "bo": jax.random.normal(ks[4], (1, EMB_DIM), jnp.float32) * s,
        "ln1_g": jnp.ones((1, EMB_DIM), jnp.float32),
        "ln1_b": jnp.zeros((1, EMB_DIM), jnp.float32),
        "w1": jax.random.normal(ks[5], (FF_DIM, EMB_DIM), jnp.float32) * s,
        "b1": jax.random.normal(ks[6], (1, FF_DIM), jnp.float32) * s,
        "w2": jax.random.normal(ks[7], (EMB_DIM, FF_DIM), jnp.float32) * s,
        "b2": jnp.zeros((1, EMB_DIM), jnp.float32),
        "ln2_g": jnp.ones((1, EMB_DIM), jnp.float32),
        "ln2_b": jnp.zeros((1, EMB_DIM), jnp.float32),
    }


def init_params(key, type_to_vec_dim, output_dim=1):
    keys = jax.random.split(key, len(D_TYPES) + 3)
    proj = {}
    for i, dt in enumerate(D_TYPES):
        kw, kb = jax.random.split(keys[i])
        d = type_to_vec_dim[dt]
        proj[dt] = (
            jax.random.normal(kw, (EMB_DIM, d), jnp.float32) * 0.05,   # PyTorch (out,in)
            jax.random.normal(kb, (EMB_DIM,), jnp.float32) * 0.05,
        )
    return {
        "proj": proj,
        "trans1": _init_encoder_layer(keys[-3]),
        "trans2": _init_encoder_layer(keys[-2]),
        "last_w": jax.random.normal(keys[-1], (output_dim, EMB_DIM), jnp.float32) * 0.05,
        "last_b": jnp.zeros((output_dim,), jnp.float32),
    }


# ---------------------------------------------------------------------------
# Pure-JAX reference (correctness check)
# ---------------------------------------------------------------------------

def _ref_layer(x, attn_bias, p):
    q = x @ p["wq"].T + p["bq"]
    k = x @ p["wk"].T + p["bk"]
    v = x @ p["wv"].T + p["bv"]
    B, L, E = x.shape
    qh = q.reshape(B, L, NUM_HEADS, HEAD_DIM).transpose(0, 2, 1, 3)
    kh = k.reshape(B, L, NUM_HEADS, HEAD_DIM).transpose(0, 2, 1, 3)
    vh = v.reshape(B, L, NUM_HEADS, HEAD_DIM).transpose(0, 2, 1, 3)
    s = jnp.einsum("bhqd,bhkd->bhqk", qh, kh) / math.sqrt(HEAD_DIM)
    s = s + attn_bias
    p_attn = jax.nn.softmax(s, axis=-1)
    o = jnp.einsum("bhqk,bhkd->bhqd", p_attn, vh).transpose(0, 2, 1, 3).reshape(B, L, E)
    o = o @ p["wo"].T + p["bo"]
    y = x + o
    mu = y.mean(-1, keepdims=True)
    y = (y - mu) / jnp.sqrt(((y - mu) ** 2).mean(-1, keepdims=True) + LN_EPS)
    y = y * p["ln1_g"] + p["ln1_b"]
    ff = jnp.maximum(y @ p["w1"].T + p["b1"], 0.0) @ p["w2"].T + p["b2"]
    z = y + ff
    mu = z.mean(-1, keepdims=True)
    z = (z - mu) / jnp.sqrt(((z - mu) ** 2).mean(-1, keepdims=True) + LN_EPS)
    return z * p["ln2_g"] + p["ln2_b"]


def ref_forward(params, batch_data, batch_mask):
    xs, ms = [], []
    for dt in D_TYPES:
        w, b = params["proj"][dt]
        xs.append(batch_data[dt] @ w.T + b)
        ms.append(batch_mask[dt][..., None])
    x = jnp.concatenate(xs, axis=1)
    mask = jnp.concatenate(ms, axis=1)
    hiddens = [x]
    attn_bias = jnp.where(mask[..., 0] == 0.0, NEG_INF, 0.0)[:, None, None, :]
    x = _ref_layer(x, attn_bias, params["trans1"]); hiddens.append(x)
    x = _ref_layer(x, attn_bias, params["trans2"]); hiddens.append(x)
    summed = (x * mask).sum(1)
    count = mask.sum(1)
    mean = summed / jnp.maximum(count, 1.0)
    return mean @ params["last_w"].T + params["last_b"], hiddens


# ---------------------------------------------------------------------------

def _length_mask(lengths, L):
    return (jnp.arange(L)[None, :] < jnp.array(lengths)[:, None]).astype(jnp.float32)


if __name__ == "__main__":
    B = 2
    type_to_vec_dim = {PROTEIN: 32, MOLECULE: 16, TEXT: 24}
    seq_lens = {PROTEIN: 8, MOLECULE: 4, TEXT: 4}

    key = jax.random.PRNGKey(0)
    k_params, k_prot, k_mol, k_text = jax.random.split(key, 4)
    params = init_params(k_params, type_to_vec_dim, output_dim=1)

    batch_data = {
        PROTEIN: jax.random.normal(k_prot, (B, seq_lens[PROTEIN], type_to_vec_dim[PROTEIN]), jnp.float32),
        MOLECULE: jax.random.normal(k_mol, (B, seq_lens[MOLECULE], type_to_vec_dim[MOLECULE]), jnp.float32),
        TEXT: jax.random.normal(k_text, (B, seq_lens[TEXT], type_to_vec_dim[TEXT]), jnp.float32),
    }
    batch_mask = {
        PROTEIN: _length_mask([8, 5], seq_lens[PROTEIN]),
        MOLECULE: _length_mask([4, 2], seq_lens[MOLECULE]),
        TEXT: _length_mask([3, 4], seq_lens[TEXT]),
    }

    output, hidden_states, concat_mask = forward(params, batch_data, batch_mask)
    output = jax.block_until_ready(output)
    for h in hidden_states:
        jax.block_until_ready(h)
    jax.block_until_ready(concat_mask)

    # Correctness check against a pure-JAX reference (high-precision matmuls).
    with jax.default_matmul_precision("highest"):
        ref_out, ref_hidden = ref_forward(params, batch_data, batch_mask)
    np.testing.assert_allclose(np.asarray(hidden_states[0]), np.asarray(ref_hidden[0]),
                               atol=1e-3, rtol=1e-3)
    np.testing.assert_allclose(np.asarray(hidden_states[2]), np.asarray(ref_hidden[2]),
                               atol=2e-2, rtol=2e-2)
    np.testing.assert_allclose(np.asarray(output), np.asarray(ref_out),
                               atol=2e-2, rtol=2e-2)

    assert output.shape == (B, 1)
    assert len(hidden_states) == 3 and hidden_states[0].shape == (B, 16, EMB_DIM)
    assert concat_mask.shape == (B, 16, 1)
    print("KERNEL_OK")
</pallas_src>

<mosaic_0001>
module attributes {stable_mosaic.version = 11 : i64} {
  func.func @fused_forward_kernel(%arg0: i32, %arg1: memref<32x72xf32, #tpu.memory_space<vmem>>, %arg2: memref<32x1xf32, #tpu.memory_space<vmem>>, %arg3: memref<1x1x32xf32, #tpu.memory_space<vmem>>, %arg4: memref<32x32xf32, #tpu.memory_space<vmem>>, %arg5: memref<32x64xf32, #tpu.memory_space<vmem>>, %arg6: memref<72x64xf32, #tpu.memory_space<vmem>>, %arg7: memref<2x32xf32, #tpu.memory_space<vmem>>, %arg8: memref<64x192xf32, #tpu.memory_space<vmem>>, %arg9: memref<1x192xf32, #tpu.memory_space<vmem>>, %arg10: memref<64x64xf32, #tpu.memory_space<vmem>>, %arg11: memref<1x64xf32, #tpu.memory_space<vmem>>, %arg12: memref<1x64xf32, #tpu.memory_space<vmem>>, %arg13: memref<1x64xf32, #tpu.memory_space<vmem>>, %arg14: memref<64x128xf32, #tpu.memory_space<vmem>>, %arg15: memref<1x128xf32, #tpu.memory_space<vmem>>, %arg16: memref<128x64xf32, #tpu.memory_space<vmem>>, %arg17: memref<1x64xf32, #tpu.memory_space<vmem>>, %arg18: memref<1x64xf32, #tpu.memory_space<vmem>>, %arg19: memref<1x64xf32, #tpu.memory_space<vmem>>, %arg20: memref<64x192xf32, #tpu.memory_space<vmem>>, %arg21: memref<1x192xf32, #tpu.memory_space<vmem>>, %arg22: memref<64x64xf32, #tpu.memory_space<vmem>>, %arg23: memref<1x64xf32, #tpu.memory_space<vmem>>, %arg24: memref<1x64xf32, #tpu.memory_space<vmem>>, %arg25: memref<1x64xf32, #tpu.memory_space<vmem>>, %arg26: memref<64x128xf32, #tpu.memory_space<vmem>>, %arg27: memref<1x128xf32, #tpu.memory_space<vmem>>, %arg28: memref<128x64xf32, #tpu.memory_space<vmem>>, %arg29: memref<1x64xf32, #tpu.memory_space<vmem>>, %arg30: memref<1x64xf32, #tpu.memory_space<vmem>>, %arg31: memref<1x64xf32, #tpu.memory_space<vmem>>, %arg32: memref<64x1xf32, #tpu.memory_space<vmem>>, %arg33: memref<1x1xf32, #tpu.memory_space<vmem>>, %arg34: memref<32x64xf32, #tpu.memory_space<vmem>>, %arg35: memref<32x64xf32, #tpu.memory_space<vmem>>, %arg36: memref<32x64xf32, #tpu.memory_space<vmem>>, %arg37: memref<2x1xf32, #tpu.memory_space<vmem>>, %arg38: memref<32x64xf32, #tpu.memory_space<vmem>>) attributes {dimension_semantics = [#tpu.dimension_semantics<parallel>], iteration_bounds = array<i64: 1>, scalar_prefetch = 0 : i64, scratch_operands = 1 : i64, tpu.core_type = #tpu.core_type<tc>, window_params = [{transform_indices = @transform_0, window_bounds = array<i64: 32, 72>}, {transform_indices = @transform_1, window_bounds = array<i64: 32, 1>}, {transform_indices = @transform_2, window_bounds = array<i64: 1, 1, 32>}, {pipeline_mode = #tpu.pipeline_mode<synchronous>, transform_indices = @transform_3, window_bounds = array<i64: 32, 32>}, {pipeline_mode = #tpu.pipeline_mode<synchronous>, transform_indices = @transform_4, window_bounds = array<i64: 32, 64>}, {pipeline_mode = #tpu.pipeline_mode<synchronous>, transform_indices = @transform_5, window_bounds = array<i64: 72, 64>}, {pipeline_mode = #tpu.pipeline_mode<synchronous>, transform_indices = @transform_6, window_bounds = array<i64: 2, 32>}, {pipeline_mode = #tpu.pipeline_mode<synchronous>, transform_indices = @transform_7, window_bounds = array<i64: 64, 192>}, {pipeline_mode = #tpu.pipeline_mode<synchronous>, transform_indices = @transform_8, window_bounds = array<i64: 1, 192>}, {pipeline_mode = #tpu.pipeline_mode<synchronous>, transform_indices = @transform_9, window_bounds = array<i64: 64, 64>}, {pipeline_mode = #tpu.pipeline_mode<synchronous>, transform_indices = @transform_10, window_bounds = array<i64: 1, 64>}, {pipeline_mode = #tpu.pipeline_mode<synchronous>, transform_indices = @transform_11, window_bounds = array<i64: 1, 64>}, {pipeline_mode = #tpu.pipeline_mode<synchronous>, transform_indices = @transform_12, window_bounds = array<i64: 1, 64>}, {pipeline_mode = #tpu.pipeline_mode<synchronous>, transform_indices = @transform_13, window_bounds = array<i64: 64, 128>}, {pipeline_mode = #tpu.pipeline_mode<synchronous>, transform_indices = @transform_14, window_bounds = array<i64: 1, 128>}, {pipeline_mode = #tpu.pipeline_mode<synchronous>, transform_indices = @transform_15, window_bounds = array<i64: 128, 64>}, {pipeline_mode = #tpu.pipeline_mode<synchronous>, transform_indices = @transform_16, window_bounds = array<i64: 1, 64>}, {pipeline_mode = #tpu.pipeline_mode<synchronous>, transform_indices = @transform_17, window_bounds = array<i64: 1, 64>}, {pipeline_mode = #tpu.pipeline_mode<synchronous>, transform_indices = @transform_18, window_bounds = array<i64: 1, 64>}, {pipeline_mode = #tpu.pipeline_mode<synchronous>, transform_indices = @transform_19, window_bounds = array<i64: 64, 192>}, {pipeline_mode = #tpu.pipeline_mode<synchronous>, transform_indices = @transform_20, window_bounds = array<i64: 1, 192>}, {pipeline_mode = #tpu.pipeline_mode<synchronous>, transform_indices = @transform_21, window_bounds = array<i64: 64, 64>}, {pipeline_mode = #tpu.pipeline_mode<synchronous>, transform_indices = @transform_22, window_bounds = array<i64: 1, 64>}, {pipeline_mode = #tpu.pipeline_mode<synchronous>, transform_indices = @transform_23, window_bounds = array<i64: 1, 64>}, {pipeline_mode = #tpu.pipeline_mode<synchronous>, transform_indices = @transform_24, window_bounds = array<i64: 1, 64>}, {pipeline_mode = #tpu.pipeline_mode<synchronous>, transform_indices = @transform_25, window_bounds = array<i64: 64, 128>}, {pipeline_mode = #tpu.pipeline_mode<synchronous>, transform_indices = @transform_26, window_bounds = array<i64: 1, 128>}, {pipeline_mode = #tpu.pipeline_mode<synchronous>, transform_indices = @transform_27, window_bounds = array<i64: 128, 64>}, {pipeline_mode = #tpu.pipeline_mode<synchronous>, transform_indices = @transform_28, window_bounds = array<i64: 1, 64>}, {pipeline_mode = #tpu.pipeline_mode<synchronous>, transform_indices = @transform_29, window_bounds = array<i64: 1, 64>}, {pipeline_mode = #tpu.pipeline_mode<synchronous>, transform_indices = @transform_30, window_bounds = array<i64: 1, 64>}, {pipeline_mode = #tpu.pipeline_mode<synchronous>, transform_indices = @transform_31, window_bounds = array<i64: 64, 1>}, {pipeline_mode = #tpu.pipeline_mode<synchronous>, transform_indices = @transform_32, window_bounds = array<i64: 1, 1>}, {transform_indices = @transform_33, window_bounds = array<i64: 32, 64>}, {transform_indices = @transform_34, window_bounds = array<i64: 32, 64>}, {transform_indices = @transform_35, window_bounds = array<i64: 32, 64>}, {transform_indices = @transform_36, window_bounds = array<i64: 2, 1>}]} {
    %c0 = arith.constant 0 : index
    %c0_0 = arith.constant 0 : index
    %0 = vector.load %arg1[%c0, %c0_0] : memref<32x72xf32, #tpu.memory_space<vmem>>, vector<32x72xf32>
    %c0_1 = arith.constant 0 : index
    %c0_2 = arith.constant 0 : index
    %1 = vector.load %arg6[%c0_1, %c0_2] : memref<72x64xf32, #tpu.memory_space<vmem>>, vector<72x64xf32>
    %cst = arith.constant dense<0.000000e+00> : vector<32x64xf32>
    %2 = tpu.matmul %0, %1, %cst {dimension_numbers = #tpu.dot_dimension_numbers<[1], [0], [0], [1], [0, 0, 1, 1], [], []>} : vector<32x72xf32>, vector<72x64xf32>, vector<32x64xf32> -> vector<32x64xf32>
    %c0_3 = arith.constant 0 : index
    %c0_4 = arith.constant 0 : index
    %3 = vector.load %arg5[%c0_3, %c0_4] : memref<32x64xf32, #tpu.memory_space<vmem>>, vector<32x64xf32>
    %4 = arith.addf %2, %3 : vector<32x64xf32>
    %c0_5 = arith.constant 0 : index
    %c0_6 = arith.constant 0 : index
    %5 = vector.load %arg34[%c0_5, %c0_6] : memref<32x64xf32, #tpu.memory_space<vmem>>, vector<32x64xf32>
    tpu.vector_store %arg34[%c0_5, %c0_6], %4 {strides = array<i32>} : memref<32x64xf32, #tpu.memory_space<vmem>>, vector<32x64xf32>,
    %c0_7 = arith.constant 0 : index
    %c0_8 = arith.constant 0 : index
    %6 = vector.load %arg4[%c0_7, %c0_8] : memref<32x32xf32, #tpu.memory_space<vmem>>, vector<32x32xf32>
    %c0_9 = arith.constant 0 : index
    %c0_10 = arith.constant 0 : index
    %c0_11 = arith.constant 0 : index
    %7 = vector.load %arg3[%c0_9, %c0_10, %c0_11] : memref<1x1x32xf32, #tpu.memory_space<vmem>>, vector<1x1x32xf32>
    %8 = vector.shape_cast %7 : vector<1x1x32xf32> to vector<1x32xf32>
    %9 = vector.broadcast %8 : vector<1x32xf32> to vector<32x32xf32>
    %10 = arith.addf %6, %9 : vector<32x32xf32>
    %c0_12 = arith.constant 0 : index
    %c0_13 = arith.constant 0 : index
    %11 = vector.load %arg8[%c0_12, %c0_13] : memref<64x192xf32, #tpu.memory_space<vmem>>, vector<64x192xf32>
    %cst_14 = arith.constant dense<0.000000e+00> : vector<32x192xf32>
    %12 = tpu.matmul %4, %11, %cst_14 {dimension_numbers = #tpu.dot_dimension_numbers<[1], [0], [0], [1], [0, 0, 1, 1], [], []>} : vector<32x64xf32>, vector<64x192xf32>, vector<32x192xf32> -> vector<32x192xf32>
    %c0_15 = arith.constant 0 : index
    %c0_16 = arith.constant 0 : index
    %13 = vector.load %arg9[%c0_15, %c0_16] : memref<1x192xf32, #tpu.memory_space<vmem>>, vector<1x192xf32>
    %14 = vector.broadcast %13 : vector<1x192xf32> to vector<32x192xf32>
    %15 = arith.addf %12, %14 : vector<32x192xf32>
    %16 = vector.extract_strided_slice %15 {offsets = [0, 0], sizes = [32, 64], strides = [1, 1]} : vector<32x192xf32> to vector<32x64xf32>
    %17 = vector.extract_strided_slice %15 {offsets = [0, 64], sizes = [32, 64], strides = [1, 1]} : vector<32x192xf32> to vector<32x64xf32>
    %18 = vector.extract_strided_slice %15 {offsets = [0, 128], sizes = [32, 64], strides = [1, 1]} : vector<32x192xf32> to vector<32x64xf32>
    %19 = vector.extract_strided_slice %16 {offsets = [0, 0], sizes = [32, 32], strides = [1, 1]} : vector<32x64xf32> to vector<32x32xf32>
    %20 = vector.extract_strided_slice %17 {offsets = [0, 0], sizes = [32, 32], strides = [1, 1]} : vector<32x64xf32> to vector<32x32xf32>
    %21 = vector.extract_strided_slice %18 {offsets = [0, 0], sizes = [32, 32], strides = [1, 1]} : vector<32x64xf32> to vector<32x32xf32>
    %cst_17 = arith.constant dense<0.000000e+00> : vector<32x32xf32>
    %22 = tpu.matmul %19, %20, %cst_17 {dimension_numbers = #tpu.dot_dimension_numbers<[1], [1], [0], [0], [0, 0, 1, 0], [], []>} : vector<32x32xf32>, vector<32x32xf32>, vector<32x32xf32> -> vector<32x32xf32>
    %cst_18 = arith.constant 0.176776692 : f32
    %23 = vector.broadcast %cst_18 : f32 to vector<32x32xf32>
    %24 = arith.mulf %22, %23 : vector<32x32xf32>
    %25 = arith.addf %24, %10 : vector<32x32xf32>
    %cst_19 = arith.constant dense<0xFF800000> : vector<32xf32>
    %26 = vector.multi_reduction <maximumf>, %25, %cst_19 [1] : vector<32x32xf32> to vector<32xf32>
    %27 = vector.shape_cast %26 : vector<32xf32> to vector<32x1xf32>
    %28 = vector.broadcast %27 : vector<32x1xf32> to vector<32x32xf32>
    %29 = arith.subf %25, %28 : vector<32x32xf32>
    %30 = math.exp %29 : vector<32x32xf32>
    %cst_20 = arith.constant dense<0.000000e+00> : vector<32xf32>
    %31 = vector.multi_reduction <add>, %30, %cst_20 [1] : vector<32x32xf32> to vector<32xf32>
    %32 = vector.shape_cast %31 : vector<32xf32> to vector<32x1xf32>
    %33 = tpu.reciprocal %32 {approx = true} : vector<32x1xf32> -> vector<32x1xf32>
    %34 = vector.broadcast %33 : vector<32x1xf32> to vector<32x32xf32>
    %35 = arith.mulf %30, %34 : vector<32x32xf32>
    %cst_21 = arith.constant dense<0.000000e+00> : vector<32x32xf32>
    %36 = tpu.matmul %35, %21, %cst_21 {dimension_numbers = #tpu.dot_dimension_numbers<[1], [0], [0], [1], [0, 0, 1, 1], [], []>} : vector<32x32xf32>, vector<32x32xf32>, vector<32x32xf32> -> vector<32x32xf32>
    %c0_22 = arith.constant 0 : index
    %c0_23 = arith.constant 0 : index
    %37 = vector.load %arg38[%c0_22, %c0_23] : memref<32x64xf32, #tpu.memory_space<vmem>>, vector<32x32xf32>
    tpu.vector_store %arg38[%c0_22, %c0_23], %36 {strides = array<i32>} : memref<32x64xf32, #tpu.memory_space<vmem>>, vector<32x32xf32>,
    %38 = vector.extract_strided_slice %16 {offsets = [0, 32], sizes = [32, 32], strides = [1, 1]} : vector<32x64xf32> to vector<32x32xf32>
    %39 = vector.extract_strided_slice %17 {offsets = [0, 32], sizes = [32, 32], strides = [1, 1]} : vector<32x64xf32> to vector<32x32xf32>
    %40 = vector.extract_strided_slice %18 {offsets = [0, 32], sizes = [32, 32], strides = [1, 1]} : vector<32x64xf32> to vector<32x32xf32>
    %cst_24 = arith.constant dense<0.000000e+00> : vector<32x32xf32>
    %41 = tpu.matmul %38, %39, %cst_24 {dimension_numbers = #tpu.dot_dimension_numbers<[1], [1], [0], [0], [0, 0, 1, 0], [], []>} : vector<32x32xf32>, vector<32x32xf32>, vector<32x32xf32> -> vector<32x32xf32>
    %cst_25 = arith.constant 0.176776692 : f32
    %42 = vector.broadcast %cst_25 : f32 to vector<32x32xf32>
    %43 = arith.mulf %41, %42 : vector<32x32xf32>
    %44 = arith.addf %43, %10 : vector<32x32xf32>
    %cst_26 = arith.constant dense<0xFF800000> : vector<32xf32>
    %45 = vector.multi_reduction <maximumf>, %44, %cst_26 [1] : vector<32x32xf32> to vector<32xf32>
    %46 = vector.shape_cast %45 : vector<32xf32> to vector<32x1xf32>
    %47 = vector.broadcast %46 : vector<32x1xf32> to vector<32x32xf32>
    %48 = arith.subf %44, %47 : vector<32x32xf32>
    %49 = math.exp %48 : vector<32x32xf32>
    %cst_27 = arith.constant dense<0.000000e+00> : vector<32xf32>
    %50 = vector.multi_reduction <add>, %49, %cst_27 [1] : vector<32x32xf32> to vector<32xf32>
    %51 = vector.shape_cast %50 : vector<32xf32> to vector<32x1xf32>
    %52 = tpu.reciprocal %51 {approx = true} : vector<32x1xf32> -> vector<32x1xf32>
    %53 = vector.broadcast %52 : vector<32x1xf32> to vector<32x32xf32>
    %54 = arith.mulf %49, %53 : vector<32x32xf32>
    %cst_28 = arith.constant dense<0.000000e+00> : vector<32x32xf32>
    %55 = tpu.matmul %54, %40, %cst_28 {dimension_numbers = #tpu.dot_dimension_numbers<[1], [0], [0], [1], [0, 0, 1, 1], [], []>} : vector<32x32xf32>, vector<32x32xf32>, vector<32x32xf32> -> vector<32x32xf32>
    %c0_29 = arith.constant 0 : index
    %c32 = arith.constant 32 : index
    %56 = vector.load %arg38[%c0_29, %c32] : memref<32x64xf32, #tpu.memory_space<vmem>>, vector<32x32xf32>
    tpu.vector_store %arg38[%c0_29, %c32], %55 {strides = array<i32>} : memref<32x64xf32, #tpu.memory_space<vmem>>, vector<32x32xf32>,
    %c0_30 = arith.constant 0 : index
    %c0_31 = arith.constant 0 : index
    %57 = vector.load %arg38[%c0_30, %c0_31] : memref<32x64xf32, #tpu.memory_space<vmem>>, vector<32x64xf32>
    %c0_32 = arith.constant 0 : index
    %c0_33 = arith.constant 0 : index
    %58 = vector.load %arg10[%c0_32, %c0_33] : memref<64x64xf32, #tpu.memory_space<vmem>>, vector<64x64xf32>
    %cst_34 = arith.constant dense<0.000000e+00> : vector<32x64xf32>
    %59 = tpu.matmul %57, %58, %cst_34 {dimension_numbers = #tpu.dot_dimension_numbers<[1], [0], [0], [1], [0, 0, 1, 1], [], []>} : vector<32x64xf32>, vector<64x64xf32>, vector<32x64xf32> -> vector<32x64xf32>
    %c0_35 = arith.constant 0 : index
    %c0_36 = arith.constant 0 : index
    %60 = vector.load %arg11[%c0_35, %c0_36] : memref<1x64xf32, #tpu.memory_space<vmem>>, vector<1x64xf32>
    %61 = vector.broadcast %60 : vector<1x64xf32> to vector<32x64xf32>
    %62 = arith.addf %59, %61 : vector<32x64xf32>
    %63 = arith.addf %4, %62 : vector<32x64xf32>
    %c0_37 = arith.constant 0 : index
    %c0_38 = arith.constant 0 : index
    %64 = vector.load %arg12[%c0_37, %c0_38] : memref<1x64xf32, #tpu.memory_space<vmem>>, vector<1x64xf32>
    %c0_39 = arith.constant 0 : index
    %c0_40 = arith.constant 0 : index
    %65 = vector.load %arg13[%c0_39, %c0_40] : memref<1x64xf32, #tpu.memory_space<vmem>>, vector<1x64xf32>
    %cst_41 = arith.constant dense<0.000000e+00> : vector<32xf32>
    %66 = vector.multi_reduction <add>, %63, %cst_41 [1] : vector<32x64xf32> to vector<32xf32>
    %67 = vector.shape_cast %66 : vector<32xf32> to vector<32x1xf32>
    %cst_42 = arith.constant 6.400000e+01 : f32
    %68 = vector.broadcast %cst_42 : f32 to vector<32x1xf32>
    %69 = arith.divf %67, %68 : vector<32x1xf32>
    %70 = vector.broadcast %69 : vector<32x1xf32> to vector<32x64xf32>
    %71 = arith.subf %63, %70 : vector<32x64xf32>
    %72 = arith.mulf %71, %71 : vector<32x64xf32>
    %cst_43 = arith.constant dense<0.000000e+00> : vector<32xf32>
    %73 = vector.multi_reduction <add>, %72, %cst_43 [1] : vector<32x64xf32> to vector<32xf32>
    %74 = vector.shape_cast %73 : vector<32xf32> to vector<32x1xf32>
    %cst_44 = arith.constant 6.400000e+01 : f32
    %75 = vector.broadcast %cst_44 : f32 to vector<32x1xf32>
    %76 = arith.divf %74, %75 : vector<32x1xf32>
    %77 = vector.broadcast %69 : vector<32x1xf32> to vector<32x64xf32>
    %78 = arith.subf %63, %77 : vector<32x64xf32>
    %cst_45 = arith.constant 9.99999974E-6 : f32
    %79 = vector.broadcast %cst_45 : f32 to vector<32x1xf32>
    %80 = arith.addf %76, %79 : vector<32x1xf32>
    %81 = math.rsqrt %80 : vector<32x1xf32>
    %82 = vector.broadcast %81 : vector<32x1xf32> to vector<32x64xf32>
    %83 = arith.mulf %78, %82 : vector<32x64xf32>
    %84 = vector.broadcast %64 : vector<1x64xf32> to vector<32x64xf32>
    %85 = arith.mulf %83, %84 : vector<32x64xf32>
    %86 = vector.broadcast %65 : vector<1x64xf32> to vector<32x64xf32>
    %87 = arith.addf %85, %86 : vector<32x64xf32>
    %c0_46 = arith.constant 0 : index
    %c0_47 = arith.constant 0 : index
    %88 = vector.load %arg14[%c0_46, %c0_47] : memref<64x128xf32, #tpu.memory_space<vmem>>, vector<64x128xf32>
    %cst_48 = arith.constant dense<0.000000e+00> : vector<32x128xf32>
    %89 = tpu.matmul %87, %88, %cst_48 {dimension_numbers = #tpu.dot_dimension_numbers<[1], [0], [0], [1], [0, 0, 1, 1], [], []>} : vector<32x64xf32>, vector<64x128xf32>, vector<32x128xf32> -> vector<32x128xf32>
    %c0_49 = arith.constant 0 : index
    %c0_50 = arith.constant 0 : index
    %90 = vector.load %arg15[%c0_49, %c0_50] : memref<1x128xf32, #tpu.memory_space<vmem>>, vector<1x128xf32>
    %91 = vector.broadcast %90 : vector<1x128xf32> to vector<32x128xf32>
    %92 = arith.addf %89, %91 : vector<32x128xf32>
    %cst_51 = arith.constant 0.000000e+00 : f32
    %93 = vector.broadcast %cst_51 : f32 to vector<32x128xf32>
    %94 = arith.maximumf %92, %93 : vector<32x128xf32>
    %c0_52 = arith.constant 0 : index
    %c0_53 = arith.constant 0 : index
    %95 = vector.load %arg16[%c0_52, %c0_53] : memref<128x64xf32, #tpu.memory_space<vmem>>, vector<128x64xf32>
    %cst_54 = arith.constant dense<0.000000e+00> : vector<32x64xf32>
    %96 = tpu.matmul %94, %95, %cst_54 {dimension_numbers = #tpu.dot_dimension_numbers<[1], [0], [0], [1], [0, 0, 1, 1], [], []>} : vector<32x128xf32>, vector<128x64xf32>, vector<32x64xf32> -> vector<32x64xf32>
    %c0_55 = arith.constant 0 : index
    %c0_56 = arith.constant 0 : index
    %97 = vector.load %arg17[%c0_55, %c0_56] : memref<1x64xf32, #tpu.memory_space<vmem>>, vector<1x64xf32>
    %98 = vector.broadcast %97 : vector<1x64xf32> to vector<32x64xf32>
    %99 = arith.addf %96, %98 : vector<32x64xf32>
    %100 = arith.addf %87, %99 : vector<32x64xf32>
    %c0_57 = arith.constant 0 : index
    %c0_58 = arith.constant 0 : index
    %101 = vector.load %arg18[%c0_57, %c0_58] : memref<1x64xf32, #tpu.memory_space<vmem>>, vector<1x64xf32>
    %c0_59 = arith.constant 0 : index
    %c0_60 = arith.constant 0 : index
    %102 = vector.load %arg19[%c0_59, %c0_60] : memref<1x64xf32, #tpu.memory_space<vmem>>, vector<1x64xf32>
    %cst_61 = arith.constant dense<0.000000e+00> : vector<32xf32>
    %103 = vector.multi_reduction <add>, %100, %cst_61 [1] : vector<32x64xf32> to vector<32xf32>
    %104 = vector.shape_cast %103 : vector<32xf32> to vector<32x1xf32>
    %cst_62 = arith.constant 6.400000e+01 : f32
    %105 = vector.broadcast %cst_62 : f32 to vector<32x1xf32>
    %106 = arith.divf %104, %105 : vector<32x1xf32>
    %107 = vector.broadcast %106 : vector<32x1xf32> to vector<32x64xf32>
    %108 = arith.subf %100, %107 : vector<32x64xf32>
    %109 = arith.mulf %108, %108 : vector<32x64xf32>
    %cst_63 = arith.constant dense<0.000000e+00> : vector<32xf32>
    %110 = vector.multi_reduction <add>, %109, %cst_63 [1] : vector<32x64xf32> to vector<32xf32>
    %111 = vector.shape_cast %110 : vector<32xf32> to vector<32x1xf32>
    %cst_64 = arith.constant 6.400000e+01 : f32
    %112 = vector.broadcast %cst_64 : f32 to vector<32x1xf32>
    %113 = arith.divf %111, %112 : vector<32x1xf32>
    %114 = vector.broadcast %106 : vector<32x1xf32> to vector<32x64xf32>
    %115 = arith.subf %100, %114 : vector<32x64xf32>
    %cst_65 = arith.constant 9.99999974E-6 : f32
    %116 = vector.broadcast %cst_65 : f32 to vector<32x1xf32>
    %117 = arith.addf %113, %116 : vector<32x1xf32>
    %118 = math.rsqrt %117 : vector<32x1xf32>
    %119 = vector.broadcast %118 : vector<32x1xf32> to vector<32x64xf32>
    %120 = arith.mulf %115, %119 : vector<32x64xf32>
    %121 = vector.broadcast %101 : vector<1x64xf32> to vector<32x64xf32>
    %122 = arith.mulf %120, %121 : vector<32x64xf32>
    %123 = vector.broadcast %102 : vector<1x64xf32> to vector<32x64xf32>
    %124 = arith.addf %122, %123 : vector<32x64xf32>
    %c0_66 = arith.constant 0 : index
    %c0_67 = arith.constant 0 : index
    %125 = vector.load %arg35[%c0_66, %c0_67] : memref<32x64xf32, #tpu.memory_space<vmem>>, vector<32x64xf32>
    tpu.vector_store %arg35[%c0_66, %c0_67], %124 {strides = array<i32>} : memref<32x64xf32, #tpu.memory_space<vmem>>, vector<32x64xf32>,
    %c0_68 = arith.constant 0 : index
    %c0_69 = arith.constant 0 : index
    %126 = vector.load %arg20[%c0_68, %c0_69] : memref<64x192xf32, #tpu.memory_space<vmem>>, vector<64x192xf32>
    %cst_70 = arith.constant dense<0.000000e+00> : vector<32x192xf32>
    %127 = tpu.matmul %124, %126, %cst_70 {dimension_numbers = #tpu.dot_dimension_numbers<[1], [0], [0], [1], [0, 0, 1, 1], [], []>} : vector<32x64xf32>, vector<64x192xf32>, vector<32x192xf32> -> vector<32x192xf32>
    %c0_71 = arith.constant 0 : index
    %c0_72 = arith.constant 0 : index
    %128 = vector.load %arg21[%c0_71, %c0_72] : memref<1x192xf32, #tpu.memory_space<vmem>>, vector<1x192xf32>
    %129 = vector.broadcast %128 : vector<1x192xf32> to vector<32x192xf32>
    %130 = arith.addf %127, %129 : vector<32x192xf32>
    %131 = vector.extract_strided_slice %130 {offsets = [0, 0], sizes = [32, 64], strides = [1, 1]} : vector<32x192xf32> to vector<32x64xf32>
    %132 = vector.extract_strided_slice %130 {offsets = [0, 64], sizes = [32, 64], strides = [1, 1]} : vector<32x192xf32> to vector<32x64xf32>
    %133 = vector.extract_strided_slice %130 {offsets = [0, 128], sizes = [32, 64], strides = [1, 1]} : vector<32x192xf32> to vector<32x64xf32>
    %134 = vector.extract_strided_slice %131 {offsets = [0, 0], sizes = [32, 32], strides = [1, 1]} : vector<32x64xf32> to vector<32x32xf32>
    %135 = vector.extract_strided_slice %132 {offsets = [0, 0], sizes = [32, 32], strides = [1, 1]} : vector<32x64xf32> to vector<32x32xf32>
    %136 = vector.extract_strided_slice %133 {offsets = [0, 0], sizes = [32, 32], strides = [1, 1]} : vector<32x64xf32> to vector<32x32xf32>
    %cst_73 = arith.constant dense<0.000000e+00> : vector<32x32xf32>
    %137 = tpu.matmul %134, %135, %cst_73 {dimension_numbers = #tpu.dot_dimension_numbers<[1], [1], [0], [0], [0, 0, 1, 0], [], []>} : vector<32x32xf32>, vector<32x32xf32>, vector<32x32xf32> -> vector<32x32xf32>
    %cst_74 = arith.constant 0.176776692 : f32
    %138 = vector.broadcast %cst_74 : f32 to vector<32x32xf32>
    %139 = arith.mulf %137, %138 : vector<32x32xf32>
    %140 = arith.addf %139, %10 : vector<32x32xf32>
    %cst_75 = arith.constant dense<0xFF800000> : vector<32xf32>
    %141 = vector.multi_reduction <maximumf>, %140, %cst_75 [1] : vector<32x32xf32> to vector<32xf32>
    %142 = vector.shape_cast %141 : vector<32xf32> to vector<32x1xf32>
    %143 = vector.broadcast %142 : vector<32x1xf32> to vector<32x32xf32>
    %144 = arith.subf %140, %143 : vector<32x32xf32>
    %145 = math.exp %144 : vector<32x32xf32>
    %cst_76 = arith.constant dense<0.000000e+00> : vector<32xf32>
    %146 = vector.multi_reduction <add>, %145, %cst_76 [1] : vector<32x32xf32> to vector<32xf32>
    %147 = vector.shape_cast %146 : vector<32xf32> to vector<32x1xf32>
    %148 = tpu.reciprocal %147 {approx = true} : vector<32x1xf32> -> vector<32x1xf32>
    %149 = vector.broadcast %148 : vector<32x1xf32> to vector<32x32xf32>
    %150 = arith.mulf %145, %149 : vector<32x32xf32>
    %cst_77 = arith.constant dense<0.000000e+00> : vector<32x32xf32>
    %151 = tpu.matmul %150, %136, %cst_77 {dimension_numbers = #tpu.dot_dimension_numbers<[1], [0], [0], [1], [0, 0, 1, 1], [], []>} : vector<32x32xf32>, vector<32x32xf32>, vector<32x32xf32> -> vector<32x32xf32>
    %c0_78 = arith.constant 0 : index
    %c0_79 = arith.constant 0 : index
    %152 = vector.load %arg38[%c0_78, %c0_79] : memref<32x64xf32, #tpu.memory_space<vmem>>, vector<32x32xf32>
    tpu.vector_store %arg38[%c0_78, %c0_79], %151 {strides = array<i32>} : memref<32x64xf32, #tpu.memory_space<vmem>>, vector<32x32xf32>,
    %153 = vector.extract_strided_slice %131 {offsets = [0, 32], sizes = [32, 32], strides = [1, 1]} : vector<32x64xf32> to vector<32x32xf32>
    %154 = vector.extract_strided_slice %132 {offsets = [0, 32], sizes = [32, 32], strides = [1, 1]} : vector<32x64xf32> to vector<32x32xf32>
    %155 = vector.extract_strided_slice %133 {offsets = [0, 32], sizes = [32, 32], strides = [1, 1]} : vector<32x64xf32> to vector<32x32xf32>
    %cst_80 = arith.constant dense<0.000000e+00> : vector<32x32xf32>
    %156 = tpu.matmul %153, %154, %cst_80 {dimension_numbers = #tpu.dot_dimension_numbers<[1], [1], [0], [0], [0, 0, 1, 0], [], []>} : vector<32x32xf32>, vector<32x32xf32>, vector<32x32xf32> -> vector<32x32xf32>
    %cst_81 = arith.constant 0.176776692 : f32
    %157 = vector.broadcast %cst_81 : f32 to vector<32x32xf32>
    %158 = arith.mulf %156, %157 : vector<32x32xf32>
    %159 = arith.addf %158, %10 : vector<32x32xf32>
    %cst_82 = arith.constant dense<0xFF800000> : vector<32xf32>
    %160 = vector.multi_reduction <maximumf>, %159, %cst_82 [1] : vector<32x32xf32> to vector<32xf32>
    %161 = vector.shape_cast %160 : vector<32xf32> to vector<32x1xf32>
    %162 = vector.broadcast %161 : vector<32x1xf32> to vector<32x32xf32>
    %163 = arith.subf %159, %162 : vector<32x32xf32>
    %164 = math.exp %163 : vector<32x32xf32>
    %cst_83 = arith.constant dense<0.000000e+00> : vector<32xf32>
    %165 = vector.multi_reduction <add>, %164, %cst_83 [1] : vector<32x32xf32> to vector<32xf32>
    %166 = vector.shape_cast %165 : vector<32xf32> to vector<32x1xf32>
    %167 = tpu.reciprocal %166 {approx = true} : vector<32x1xf32> -> vector<32x1xf32>
    %168 = vector.broadcast %167 : vector<32x1xf32> to vector<32x32xf32>
    %169 = arith.mulf %164, %168 : vector<32x32xf32>
    %cst_84 = arith.constant dense<0.000000e+00> : vector<32x32xf32>
    %170 = tpu.matmul %169, %155, %cst_84 {dimension_numbers = #tpu.dot_dimension_numbers<[1], [0], [0], [1], [0, 0, 1, 1], [], []>} : vector<32x32xf32>, vector<32x32xf32>, vector<32x32xf32> -> vector<32x32xf32>
    %c0_85 = arith.constant 0 : index
    %c32_86 = arith.constant 32 : index
    %171 = vector.load %arg38[%c0_85, %c32_86] : memref<32x64xf32, #tpu.memory_space<vmem>>, vector<32x32xf32>
    tpu.vector_store %arg38[%c0_85, %c32_86], %170 {strides = array<i32>} : memref<32x64xf32, #tpu.memory_space<vmem>>, vector<32x32xf32>,
    %c0_87 = arith.constant 0 : index
    %c0_88 = arith.constant 0 : index
    %172 = vector.load %arg38[%c0_87, %c0_88] : memref<32x64xf32, #tpu.memory_space<vmem>>, vector<32x64xf32>
    %c0_89 = arith.constant 0 : index
    %c0_90 = arith.constant 0 : index
    %173 = vector.load %arg22[%c0_89, %c0_90] : memref<64x64xf32, #tpu.memory_space<vmem>>, vector<64x64xf32>
    %cst_91 = arith.constant dense<0.000000e+00> : vector<32x64xf32>
    %174 = tpu.matmul %172, %173, %cst_91 {dimension_numbers = #tpu.dot_dimension_numbers<[1], [0], [0], [1], [0, 0, 1, 1], [], []>} : vector<32x64xf32>, vector<64x64xf32>, vector<32x64xf32> -> vector<32x64xf32>
    %c0_92 = arith.constant 0 : index
    %c0_93 = arith.constant 0 : index
    %175 = vector.load %arg23[%c0_92, %c0_93] : memref<1x64xf32, #tpu.memory_space<vmem>>, vector<1x64xf32>
    %176 = vector.broadcast %175 : vector<1x64xf32> to vector<32x64xf32>
    %177 = arith.addf %174, %176 : vector<32x64xf32>
    %178 = arith.addf %124, %177 : vector<32x64xf32>
    %c0_94 = arith.constant 0 : index
    %c0_95 = arith.constant 0 : index
    %179 = vector.load %arg24[%c0_94, %c0_95] : memref<1x64xf32, #tpu.memory_space<vmem>>, vector<1x64xf32>
    %c0_96 = arith.constant 0 : index
    %c0_97 = arith.constant 0 : index
    %180 = vector.load %arg25[%c0_96, %c0_97] : memref<1x64xf32, #tpu.memory_space<vmem>>, vector<1x64xf32>
    %cst_98 = arith.constant dense<0.000000e+00> : vector<32xf32>
    %181 = vector.multi_reduction <add>, %178, %cst_98 [1] : vector<32x64xf32> to vector<32xf32>
    %182 = vector.shape_cast %181 : vector<32xf32> to vector<32x1xf32>
    %cst_99 = arith.constant 6.400000e+01 : f32
    %183 = vector.broadcast %cst_99 : f32 to vector<32x1xf32>
    %184 = arith.divf %182, %183 : vector<32x1xf32>
    %185 = vector.broadcast %184 : vector<32x1xf32> to vector<32x64xf32>
    %186 = arith.subf %178, %185 : vector<32x64xf32>
    %187 = arith.mulf %186, %186 : vector<32x64xf32>
    %cst_100 = arith.constant dense<0.000000e+00> : vector<32xf32>
    %188 = vector.multi_reduction <add>, %187, %cst_100 [1] : vector<32x64xf32> to vector<32xf32>
    %189 = vector.shape_cast %188 : vector<32xf32> to vector<32x1xf32>
    %cst_101 = arith.constant 6.400000e+01 : f32
    %190 = vector.broadcast %cst_101 : f32 to vector<32x1xf32>
    %191 = arith.divf %189, %190 : vector<32x1xf32>
    %192 = vector.broadcast %184 : vector<32x1xf32> to vector<32x64xf32>
    %193 = arith.subf %178, %192 : vector<32x64xf32>
    %cst_102 = arith.constant 9.99999974E-6 : f32
    %194 = vector.broadcast %cst_102 : f32 to vector<32x1xf32>
    %195 = arith.addf %191, %194 : vector<32x1xf32>
    %196 = math.rsqrt %195 : vector<32x1xf32>
    %197 = vector.broadcast %196 : vector<32x1xf32> to vector<32x64xf32>
    %198 = arith.mulf %193, %197 : vector<32x64xf32>
    %199 = vector.broadcast %179 : vector<1x64xf32> to vector<32x64xf32>
    %200 = arith.mulf %198, %199 : vector<32x64xf32>
    %201 = vector.broadcast %180 : vector<1x64xf32> to vector<32x64xf32>
    %202 = arith.addf %200, %201 : vector<32x64xf32>
    %c0_103 = arith.constant 0 : index
    %c0_104 = arith.constant 0 : index
    %203 = vector.load %arg26[%c0_103, %c0_104] : memref<64x128xf32, #tpu.memory_space<vmem>>, vector<64x128xf32>
    %cst_105 = arith.constant dense<0.000000e+00> : vector<32x128xf32>
    %204 = tpu.matmul %202, %203, %cst_105 {dimension_numbers = #tpu.dot_dimension_numbers<[1], [0], [0], [1], [0, 0, 1, 1], [], []>} : vector<32x64xf32>, vector<64x128xf32>, vector<32x128xf32> -> vector<32x128xf32>
    %c0_106 = arith.constant 0 : index
    %c0_107 = arith.constant 0 : index
    %205 = vector.load %arg27[%c0_106, %c0_107] : memref<1x128xf32, #tpu.memory_space<vmem>>, vector<1x128xf32>
    %206 = vector.broadcast %205 : vector<1x128xf32> to vector<32x128xf32>
    %207 = arith.addf %204, %206 : vector<32x128xf32>
    %cst_108 = arith.constant 0.000000e+00 : f32
    %208 = vector.broadcast %cst_108 : f32 to vector<32x128xf32>
    %209 = arith.maximumf %207, %208 : vector<32x128xf32>
    %c0_109 = arith.constant 0 : index
    %c0_110 = arith.constant 0 : index
    %210 = vector.load %arg28[%c0_109, %c0_110] : memref<128x64xf32, #tpu.memory_space<vmem>>, vector<128x64xf32>
    %cst_111 = arith.constant dense<0.000000e+00> : vector<32x64xf32>
    %211 = tpu.matmul %209, %210, %cst_111 {dimension_numbers = #tpu.dot_dimension_numbers<[1], [0], [0], [1], [0, 0, 1, 1], [], []>} : vector<32x128xf32>, vector<128x64xf32>, vector<32x64xf32> -> vector<32x64xf32>
    %c0_112 = arith.constant 0 : index
    %c0_113 = arith.constant 0 : index
    %212 = vector.load %arg29[%c0_112, %c0_113] : memref<1x64xf32, #tpu.memory_space<vmem>>, vector<1x64xf32>
    %213 = vector.broadcast %212 : vector<1x64xf32> to vector<32x64xf32>
    %214 = arith.addf %211, %213 : vector<32x64xf32>
    %215 = arith.addf %202, %214 : vector<32x64xf32>
    %c0_114 = arith.constant 0 : index
    %c0_115 = arith.constant 0 : index
    %216 = vector.load %arg30[%c0_114, %c0_115] : memref<1x64xf32, #tpu.memory_space<vmem>>, vector<1x64xf32>
    %c0_116 = arith.constant 0 : index
    %c0_117 = arith.constant 0 : index
    %217 = vector.load %arg31[%c0_116, %c0_117] : memref<1x64xf32, #tpu.memory_space<vmem>>, vector<1x64xf32>
    %cst_118 = arith.constant dense<0.000000e+00> : vector<32xf32>
    %218 = vector.multi_reduction <add>, %215, %cst_118 [1] : vector<32x64xf32> to vector<32xf32>
    %219 = vector.shape_cast %218 : vector<32xf32> to vector<32x1xf32>
    %cst_119 = arith.constant 6.400000e+01 : f32
    %220 = vector.broadcast %cst_119 : f32 to vector<32x1xf32>
    %221 = arith.divf %219, %220 : vector<32x1xf32>
    %222 = vector.broadcast %221 : vector<32x1xf32> to vector<32x64xf32>
    %223 = arith.subf %215, %222 : vector<32x64xf32>
    %224 = arith.mulf %223, %223 : vector<32x64xf32>
    %cst_120 = arith.constant dense<0.000000e+00> : vector<32xf32>
    %225 = vector.multi_reduction <add>, %224, %cst_120 [1] : vector<32x64xf32> to vector<32xf32>
    %226 = vector.shape_cast %225 : vector<32xf32> to vector<32x1xf32>
    %cst_121 = arith.constant 6.400000e+01 : f32
    %227 = vector.broadcast %cst_121 : f32 to vector<32x1xf32>
    %228 = arith.divf %226, %227 : vector<32x1xf32>
    %229 = vector.broadcast %221 : vector<32x1xf32> to vector<32x64xf32>
    %230 = arith.subf %215, %229 : vector<32x64xf32>
    %cst_122 = arith.constant 9.99999974E-6 : f32
    %231 = vector.broadcast %cst_122 : f32 to vector<32x1xf32>
    %232 = arith.addf %228, %231 : vector<32x1xf32>
    %233 = math.rsqrt %232 : vector<32x1xf32>
    %234 = vector.broadcast %233 : vector<32x1xf32> to vector<32x64xf32>
    %235 = arith.mulf %230, %234 : vector<32x64xf32>
    %236 = vector.broadcast %216 : vector<1x64xf32> to vector<32x64xf32>
    %237 = arith.mulf %235, %236 : vector<32x64xf32>
    %238 = vector.broadcast %217 : vector<1x64xf32> to vector<32x64xf32>
    %239 = arith.addf %237, %238 : vector<32x64xf32>
    %c0_123 = arith.constant 0 : index
    %c0_124 = arith.constant 0 : index
    %240 = vector.load %arg36[%c0_123, %c0_124] : memref<32x64xf32, #tpu.memory_space<vmem>>, vector<32x64xf32>
    tpu.vector_store %arg36[%c0_123, %c0_124], %239 {strides = array<i32>} : memref<32x64xf32, #tpu.memory_space<vmem>>, vector<32x64xf32>,
    %c0_125 = arith.constant 0 : index
    %c0_126 = arith.constant 0 : index
    %241 = vector.load %arg2[%c0_125, %c0_126] : memref<32x1xf32, #tpu.memory_space<vmem>>, vector<32x1xf32>
    %c0_127 = arith.constant 0 : index
    %c0_128 = arith.constant 0 : index
    %242 = vector.load %arg7[%c0_127, %c0_128] : memref<2x32xf32, #tpu.memory_space<vmem>>, vector<2x32xf32>
    %243 = vector.broadcast %241 : vector<32x1xf32> to vector<32x64xf32>
    %244 = arith.mulf %239, %243 : vector<32x64xf32>
    %cst_129 = arith.constant dense<0.000000e+00> : vector<2x64xf32>
    %245 = tpu.matmul %242, %244, %cst_129 {dimension_numbers = #tpu.dot_dimension_numbers<[1], [0], [0], [1], [0, 0, 1, 1], [], []>} : vector<2x32xf32>, vector<32x64xf32>, vector<2x64xf32> -> vector<2x64xf32>
    %cst_130 = arith.constant dense<0.000000e+00> : vector<2x1xf32>
    %246 = tpu.matmul %242, %241, %cst_130 {dimension_numbers = #tpu.dot_dimension_numbers<[1], [0], [0], [1], [0, 0, 1, 1], [], []>} : vector<2x32xf32>, vector<32x1xf32>, vector<2x1xf32> -> vector<2x1xf32>
    %cst_131 = arith.constant 1.000000e+00 : f32
    %247 = vector.broadcast %cst_131 : f32 to vector<2x1xf32>
    %248 = arith.maximumf %246, %247 : vector<2x1xf32>
    %249 = vector.broadcast %248 : vector<2x1xf32> to vector<2x64xf32>
    %250 = arith.divf %245, %249 : vector<2x64xf32>
    %c0_132 = arith.constant 0 : index
    %c0_133 = arith.constant 0 : index
    %251 = vector.load %arg32[%c0_132, %c0_133] : memref<64x1xf32, #tpu.memory_space<vmem>>, vector<64x1xf32>
    %cst_134 = arith.constant dense<0.000000e+00> : vector<2x1xf32>
    %252 = tpu.matmul %250, %251, %cst_134 {dimension_numbers = #tpu.dot_dimension_numbers<[1], [0], [0], [1], [0, 0, 1, 1], [], []>} : vector<2x64xf32>, vector<64x1xf32>, vector<2x1xf32> -> vector<2x1xf32>
    %c0_135 = arith.constant 0 : index
    %c0_136 = arith.constant 0 : index
    %253 = vector.load %arg33[%c0_135, %c0_136] : memref<1x1xf32, #tpu.memory_space<vmem>>, vector<1x1xf32>
    %254 = vector.broadcast %253 : vector<1x1xf32> to vector<2x1xf32>
    %255 = arith.addf %252, %254 : vector<2x1xf32>
    %c0_137 = arith.constant 0 : index
    %c0_138 = arith.constant 0 : index
    %256 = vector.load %arg37[%c0_137, %c0_138] : memref<2x1xf32, #tpu.memory_space<vmem>>, vector<2x1xf32>
    tpu.vector_store %arg37[%c0_137, %c0_138], %255 {strides = array<i32>} : memref<2x1xf32, #tpu.memory_space<vmem>>, vector<2x1xf32>,
    return
  }
  func.func @transform_0(%arg0: i32) -> (i32, i32) {
    %c0_i32 = arith.constant 0 : i32
    %c0_i32_0 = arith.constant 0 : i32
    return %arg0, %c0_i32 : i32, i32
  }
  func.func @transform_1(%arg0: i32) -> (i32, i32) {
    %c0_i32 = arith.constant 0 : i32
    %c0_i32_0 = arith.constant 0 : i32
    return %arg0, %c0_i32 : i32, i32
  }
  func.func @transform_2(%arg0: i32) -> (i32, i32, i32) {
    %c0_i32 = arith.constant 0 : i32
    %c0_i32_0 = arith.constant 0 : i32
    %c0_i32_1 = arith.constant 0 : i32
    return %arg0, %c0_i32, %c0_i32_0 : i32, i32, i32
  }
  func.func @transform_3(%arg0: i32) -> (i32, i32) {
    %c0_i32 = arith.constant 0 : i32
    %c0_i32_0 = arith.constant 0 : i32
    %c0_i32_1 = arith.constant 0 : i32
    return %c0_i32, %c0_i32_0 : i32, i32
  }
  func.func @transform_4(%arg0: i32) -> (i32, i32) {
    %c0_i32 = arith.constant 0 : i32
    %c0_i32_0 = arith.constant 0 : i32
    %c0_i32_1 = arith.constant 0 : i32
    return %c0_i32, %c0_i32_0 : i32, i32
  }
  func.func @transform_5(%arg0: i32) -> (i32, i32) {
    %c0_i32 = arith.constant 0 : i32
    %c0_i32_0 = arith.constant 0 : i32
    %c0_i32_1 = arith.constant 0 : i32
    return %c0_i32, %c0_i32_0 : i32, i32
  }
  func.func @transform_6(%arg0: i32) -> (i32, i32) {
    %c0_i32 = arith.constant 0 : i32
    %c0_i32_0 = arith.constant 0 : i32
    %c0_i32_1 = arith.constant 0 : i32
    return %c0_i32, %c0_i32_0 : i32, i32
  }
  func.func @transform_7(%arg0: i32) -> (i32, i32) {
    %c0_i32 = arith.constant 0 : i32
    %c0_i32_0 = arith.constant 0 : i32
    %c0_i32_1 = arith.constant 0 : i32
    return %c0_i32, %c0_i32_0 : i32, i32
  }
  func.func @transform_8(%arg0: i32) -> (i32, i32) {
    %c0_i32 = arith.constant 0 : i32
    %c0_i32_0 = arith.constant 0 : i32
    %c0_i32_1 = arith.constant 0 : i32
    return %c0_i32, %c0_i32_0 : i32, i32
  }
  func.func @transform_9(%arg0: i32) -> (i32, i32) {
    %c0_i32 = arith.constant 0 : i32
    %c0_i32_0 = arith.constant 0 : i32
    %c0_i32_1 = arith.constant 0 : i32
    return %c0_i32, %c0_i32_0 : i32, i32
  }
  func.func @transform_10(%arg0: i32) -> (i32, i32) {
    %c0_i32 = arith.constant 0 : i32
    %c0_i32_0 = arith.constant 0 : i32
    %c0_i32_1 = arith.constant 0 : i32
    return %c0_i32, %c0_i32_0 : i32, i32
  }
  func.func @transform_11(%arg0: i32) -> (i32, i32) {
    %c0_i32 = arith.constant 0 : i32
    %c0_i32_0 = arith.constant 0 : i32
    %c0_i32_1 = arith.constant 0 : i32
    return %c0_i32, %c0_i32_0 : i32, i32
  }
  func.func @transform_12(%arg0: i32) -> (i32, i32) {
    %c0_i32 = arith.constant 0 : i32
    %c0_i32_0 = arith.constant 0 : i32
    %c0_i32_1 = arith.constant 0 : i32
    return %c0_i32, %c0_i32_0 : i32, i32
  }
  func.func @transform_13(%arg0: i32) -> (i32, i32) {
    %c0_i32 = arith.constant 0 : i32
    %c0_i32_0 = arith.constant 0 : i32
    %c0_i32_1 = arith.constant 0 : i32
    return %c0_i32, %c0_i32_0 : i32, i32
  }
  func.func @transform_14(%arg0: i32) -> (i32, i32) {
    %c0_i32 = arith.constant 0 : i32
    %c0_i32_0 = arith.constant 0 : i32
    %c0_i32_1 = arith.constant 0 : i32
    return %c0_i32, %c0_i32_0 : i32, i32
  }
  func.func @transform_15(%arg0: i32) -> (i32, i32) {
    %c0_i32 = arith.constant 0 : i32
    %c0_i32_0 = arith.constant 0 : i32
    %c0_i32_1 = arith.constant 0 : i32
    return %c0_i32, %c0_i32_0 : i32, i32
  }
  func.func @transform_16(%arg0: i32) -> (i32, i32) {
    %c0_i32 = arith.constant 0 : i32
    %c0_i32_0 = arith.constant 0 : i32
    %c0_i32_1 = arith.constant 0 : i32
    return %c0_i32, %c0_i32_0 : i32, i32
  }
  func.func @transform_17(%arg0: i32) -> (i32, i32) {
    %c0_i32 = arith.constant 0 : i32
    %c0_i32_0 = arith.constant 0 : i32
    %c0_i32_1 = arith.constant 0 : i32
    return %c0_i32, %c0_i32_0 : i32, i32
  }
  func.func @transform_18(%arg0: i32) -> (i32, i32) {
    %c0_i32 = arith.constant 0 : i32
    %c0_i32_0 = arith.constant 0 : i32
    %c0_i32_1 = arith.constant 0 : i32
    return %c0_i32, %c0_i32_0 : i32, i32
  }
  func.func @transform_19(%arg0: i32) -> (i32, i32) {
    %c0_i32 = arith.constant 0 : i32
    %c0_i32_0 = arith.constant 0 : i32
    %c0_i32_1 = arith.constant 0 : i32
    return %c0_i32, %c0_i32_0 : i32, i32
  }
  func.func @transform_20(%arg0: i32) -> (i32, i32) {
    %c0_i32 = arith.constant 0 : i32
    %c0_i32_0 = arith.constant 0 : i32
    %c0_i32_1 = arith.constant 0 : i32
    return %c0_i32, %c0_i32_0 : i32, i32
  }
  func.func @transform_21(%arg0: i32) -> (i32, i32) {
    %c0_i32 = arith.constant 0 : i32
    %c0_i32_0 = arith.constant 0 : i32
    %c0_i32_1 = arith.constant 0 : i32
    return %c0_i32, %c0_i32_0 : i32, i32
  }
  func.func @transform_22(%arg0: i32) -> (i32, i32) {
    %c0_i32 = arith.constant 0 : i32
    %c0_i32_0 = arith.constant 0 : i32
    %c0_i32_1 = arith.constant 0 : i32
    return %c0_i32, %c0_i32_0 : i32, i32
  }
  func.func @transform_23(%arg0: i32) -> (i32, i32) {
    %c0_i32 = arith.constant 0 : i32
    %c0_i32_0 = arith.constant 0 : i32
    %c0_i32_1 = arith.constant 0 : i32
    return %c0_i32, %c0_i32_0 : i32, i32
  }
  func.func @transform_24(%arg0: i32) -> (i32, i32) {
    %c0_i32 = arith.constant 0 : i32
    %c0_i32_0 = arith.constant 0 : i32
    %c0_i32_1 = arith.constant 0 : i32
    return %c0_i32, %c0_i32_0 : i32, i32
  }
  func.func @transform_25(%arg0: i32) -> (i32, i32) {
    %c0_i32 = arith.constant 0 : i32
    %c0_i32_0 = arith.constant 0 : i32
    %c0_i32_1 = arith.constant 0 : i32
    return %c0_i32, %c0_i32_0 : i32, i32
  }
  func.func @transform_26(%arg0: i32) -> (i32, i32) {
    %c0_i32 = arith.constant 0 : i32
    %c0_i32_0 = arith.constant 0 : i32
    %c0_i32_1 = arith.constant 0 : i32
    return %c0_i32, %c0_i32_0 : i32, i32
  }
  func.func @transform_27(%arg0: i32) -> (i32, i32) {
    %c0_i32 = arith.constant 0 : i32
    %c0_i32_0 = arith.constant 0 : i32
    %c0_i32_1 = arith.constant 0 : i32
    return %c0_i32, %c0_i32_0 : i32, i32
  }
  func.func @transform_28(%arg0: i32) -> (i32, i32) {
    %c0_i32 = arith.constant 0 : i32
    %c0_i32_0 = arith.constant 0 : i32
    %c0_i32_1 = arith.constant 0 : i32
    return %c0_i32, %c0_i32_0 : i32, i32
  }
  func.func @transform_29(%arg0: i32) -> (i32, i32) {
    %c0_i32 = arith.constant 0 : i32
    %c0_i32_0 = arith.constant 0 : i32
    %c0_i32_1 = arith.constant 0 : i32
    return %c0_i32, %c0_i32_0 : i32, i32
  }
  func.func @transform_30(%arg0: i32) -> (i32, i32) {
    %c0_i32 = arith.constant 0 : i32
    %c0_i32_0 = arith.constant 0 : i32
    %c0_i32_1 = arith.constant 0 : i32
    return %c0_i32, %c0_i32_0 : i32, i32
  }
  func.func @transform_31(%arg0: i32) -> (i32, i32) {
    %c0_i32 = arith.constant 0 : i32
    %c0_i32_0 = arith.constant 0 : i32
    %c0_i32_1 = arith.constant 0 : i32
    return %c0_i32, %c0_i32_0 : i32, i32
  }
  func.func @transform_32(%arg0: i32) -> (i32, i32) {
    %c0_i32 = arith.constant 0 : i32
    %c0_i32_0 = arith.constant 0 : i32
    %c0_i32_1 = arith.constant 0 : i32
    return %c0_i32, %c0_i32_0 : i32, i32
  }
  func.func @transform_33(%arg0: i32) -> (i32, i32) {
    %c0_i32 = arith.constant 0 : i32
    %c0_i32_0 = arith.constant 0 : i32
    return %arg0, %c0_i32 : i32, i32
  }
  func.func @transform_34(%arg0: i32) -> (i32, i32) {
    %c0_i32 = arith.constant 0 : i32
    %c0_i32_0 = arith.constant 0 : i32
    return %arg0, %c0_i32 : i32, i32
  }
  func.func @transform_35(%arg0: i32) -> (i32, i32) {
    %c0_i32 = arith.constant 0 : i32
    %c0_i32_0 = arith.constant 0 : i32
    return %arg0, %c0_i32 : i32, i32
  }
  func.func @transform_36(%arg0: i32) -> (i32, i32) {
    %c0_i32 = arith.constant 0 : i32
    %c0_i32_0 = arith.constant 0 : i32
    return %arg0, %c0_i32 : i32, i32
  }
}

</mosaic_0001>

<llo_original>
// kernel: tpu_custom_call.1
$region0: #{tpu_custom_call.1}
  #allocation0 [shape = 'u32[]', space=smem, size = 0x4, offset = 0x4, fixed_abs, tag = 'smem constant byte address 0x4 - core index']
  #allocation1 [shape = 'u32[72,128]{1,0:T(1,128)}', space=vmem, size = 0x9000, scoped, tag = 'internal scratch']
  #allocation2 [shape = 'f32[32,64]{1,0:T(8,128)}', space=vmem, size = 0x4000, scoped, tag = 'scratch operand']
  #allocation3 [shape = 'f32[1,1]{1,0:T(1,128)S(1)}', space=vmem, size = 0x200, scoped, tag = 'scoped memory for tpu_custom_call.1']
  %s0 = inlined_call_operand.smem [shape: u32[37], index: -1, kind: input, shape index: {}]
  %s1 = sld [smem:[%s0]]
  %s2 = scalar_lea.smem %s0, 1
  %s3 = sld [smem:[%s2]]
  %s4 = scalar_lea.smem %s0, 2
  %s5 = sld [smem:[%s4]]
  %s6 = scalar_lea.smem %s0, 3
  %s7 = sld [smem:[%s6]]
  %s8 = scalar_lea.smem %s0, 4
  %s9 = sld [smem:[%s8]]
  %s10 = scalar_lea.smem %s0, 5
  %s11 = sld [smem:[%s10]]
  %s12 = scalar_lea.smem %s0, 6
  %s13 = sld [smem:[%s12]]
  %s14 = scalar_lea.smem %s0, 7
  %s15 = sld [smem:[%s14]]
  %s16 = scalar_lea.smem %s0, 8
  %s17 = sld [smem:[%s16]]
  %s18 = scalar_lea.smem %s0, 9
  %s19 = sld [smem:[%s18]]
  %s20 = scalar_lea.smem %s0, 10
  %s21 = sld [smem:[%s20]]
  %s22 = scalar_lea.smem %s0, 11
  %s23 = sld [smem:[%s22]]
  %s24 = scalar_lea.smem %s0, 12
  %s25 = sld [smem:[%s24]]
  %s26 = scalar_lea.smem %s0, 13
  %s27 = sld [smem:[%s26]]
  %s28 = scalar_lea.smem %s0, 14
  %s29 = sld [smem:[%s28]]
  %s30 = scalar_lea.smem %s0, 15
  %s31 = sld [smem:[%s30]]
  %s32 = scalar_lea.smem %s0, 16
  %s33 = sld [smem:[%s32]]
  %s34 = scalar_lea.smem %s0, 17
  %s35 = sld [smem:[%s34]]
  %s36 = scalar_lea.smem %s0, 18
  %s37 = sld [smem:[%s36]]
  %s38 = scalar_lea.smem %s0, 19
  %s39 = sld [smem:[%s38]]
  %s40 = scalar_lea.smem %s0, 20
  %s41 = sld [smem:[%s40]]
  %s42 = scalar_lea.smem %s0, 21
  %s43 = sld [smem:[%s42]]
  %s44 = scalar_lea.smem %s0, 22
  %s45 = sld [smem:[%s44]]
  %s46 = scalar_lea.smem %s0, 23
  %s47 = sld [smem:[%s46]]
  %s48 = scalar_lea.smem %s0, 24
  %s49 = sld [smem:[%s48]]
  %s50 = scalar_lea.smem %s0, 25
  %s51 = sld [smem:[%s50]]
  %s52 = scalar_lea.smem %s0, 26
  %s53 = sld [smem:[%s52]]
  %s54 = scalar_lea.smem %s0, 27
  %s55 = sld [smem:[%s54]]
  %s56 = scalar_lea.smem %s0, 28
  %s57 = sld [smem:[%s56]]
  %s58 = scalar_lea.smem %s0, 29
  %s59 = sld [smem:[%s58]]
  %s60 = scalar_lea.smem %s0, 30
  %s61 = sld [smem:[%s60]]
  %s62 = scalar_lea.smem %s0, 31
  %s63 = sld [smem:[%s62]]
  %s64 = scalar_lea.smem %s0, 32
  %s65 = sld [smem:[%s64]]
  %s66 = scalar_lea.smem %s0, 33
  %s67 = sld [smem:[%s66]]
  %s68 = scalar_lea.smem %s0, 34
  %s69 = sld [smem:[%s68]]
  %s70 = scalar_lea.smem %s0, 35
  %s71 = sld [smem:[%s70]]
  %s72 = scalar_lea.smem %s0, 36
  %s73 = sld [smem:[%s72]]
  %74 = xla_tuple %s67, %s69, %s71, %s73
  %s75 = sld [smem:[#allocation0]]
  $region182: #{tpu_custom_call.1} parent=0
    _
  %s77 = ssub.s32 1, %s75
  %s78 = scalar_select 0, %s77, %s75
  %v79 = vstv %s65
  %80 = vst [vmem:[#allocation3] sm:$0x1] %v79
  $region1: #{tpu_custom_call.1} parent=0
    #allocation4 [shape = 'u8[16384]{0}', space=vmem, size = 0x4000, scoped, tag = 'input window, operand 3, single buffered']
    #allocation5 [shape = 's32[1]{0}', space=sflag, size = 0x4, scoped, tag = 'scoped memory for tpu_custom_call.1']
    #allocation6 [shape = 's32[1]{0}', space=sflag, size = 0x4, scoped, tag = 'scoped memory for tpu_custom_call.1']
    #allocation7 [shape = 'u8[16384]{0}', space=vmem, size = 0x4000, scoped, tag = 'input window, operand 4, single buffered']
    #allocation8 [shape = 's32[1]{0}', space=sflag, size = 0x4, scoped, tag = 'scoped memory for tpu_custom_call.1']
    #allocation9 [shape = 'u8[32768]{0}', space=vmem, size = 0x8000, scoped, tag = 'input window, operand 21, single buffered']
    #allocation10 [shape = 'u8[32768]{0}', space=vmem, size = 0x8000, scoped, tag = 'input window, operand 25, single buffered']
    #allocation11 [shape = 's32[1]{0}', space=sflag, size = 0x4, scoped, tag = 'scoped memory for tpu_custom_call.1']
    #allocation12 [shape = 'u8[16384]{0}', space=vmem, size = 0x4000, scoped, tag = 'output window, operand 0, single buffered']
    #allocation13 [shape = 'u8[16384]{0}', space=vmem, size = 0x4000, scoped, tag = 'output window, operand 1, single buffered']
    #allocation14 [shape = 's32[1]{0}', space=sflag, size = 0x4, scoped, tag = 'scoped memory for tpu_custom_call.1']
    #allocation15 [shape = 'u8[16384]{0}', space=vmem, size = 0x4000, scoped, tag = 'output window, operand 2, single buffered']
    %81 = vsyncpa [#allocation5], 0
    %82 = vsyncpa [#allocation8], 0
    %83 = vsyncpa [#allocation11], 0
    %84 = vsyncpa [#allocation6], 0
    %85 = vsyncpa [#allocation14], 0
    // Predicated region
    $region2: #{tpu_custom_call.1} parent=1 // pred_check
      _
    $region3: #{tpu_custom_call.1} parent=1 // pred_check_branch
      %87 = sbr.rel (0) target = $region5
    $region4: #{tpu_custom_call.1} parent=1 // pred_region
      _
    $region5: #{tpu_custom_call.1} parent=1 // pred_fallthru
      _
    // Predicated region
    $region6: #{tpu_custom_call.1} parent=1 // pred_check
      _
    $region7: #{tpu_custom_call.1} parent=1 // pred_check_branch
      %89 = sbr.rel (0) target = $region9
    $region8: #{tpu_custom_call.1} parent=1 // pred_region
      _
    $region9: #{tpu_custom_call.1} parent=1 // pred_fallthru
      _
    // Predicated region
    $region10: #{tpu_custom_call.1} parent=1 // pred_check
      _
    $region11: #{tpu_custom_call.1} parent=1 // pred_check_branch
      %91 = sbr.rel (0) target = $region13
    $region12: #{tpu_custom_call.1} parent=1 // pred_region
      _
    $region13: #{tpu_custom_call.1} parent=1 // pred_fallthru
      _
    // Predicated region
    $region14: #{tpu_custom_call.1} parent=1 // pred_check
      _
    $region15: #{tpu_custom_call.1} parent=1 // pred_check_branch
      %93 = sbr.rel (0) target = $region17
    $region16: #{tpu_custom_call.1} parent=1 // pred_region
      %95 = vsyncadd [#allocation5], 0
      %s96 = sshll.u32 %s7, 4
      %s97 = int_to_ptr.hbm [resolvable:$true] %s96
      %s98 = sshll.u32 [#allocation4], 4
      %s99 = int_to_ptr.vmem [resolvable:$true] %s98
      %104 = dma.hbm_to_vmem [thread:$0]  %s97, 512, %s99, [#allocation5], 128, 128, 8
    $region17: #{tpu_custom_call.1} parent=1 // pred_fallthru
      _
    // Predicated region
    $region18: #{tpu_custom_call.1} parent=1 // pred_check
      _
    $region19: #{tpu_custom_call.1} parent=1 // pred_check_branch
      %106 = sbr.rel (0) target = $region21
    $region20: #{tpu_custom_call.1} parent=1 // pred_region
      %108 = vsyncadd [#allocation8], 0
      %s109 = sshll.u32 %s9, 4
      %s110 = int_to_ptr.hbm [resolvable:$true] %s109
      %s111 = sshll.u32 [#allocation7], 4
      %s112 = int_to_ptr.vmem [resolvable:$true] %s111
      %117 = dma.hbm_to_vmem [thread:$0]  %s110, 512, %s112, [#allocation8], 128, 128, 8
    $region21: #{tpu_custom_call.1} parent=1 // pred_fallthru
      _
    // Predicated region
    $region22: #{tpu_custom_call.1} parent=1 // pred_check
      _
    $region23: #{tpu_custom_call.1} parent=1 // pred_check_branch
      %119 = sbr.rel (0) target = $region25
    $region24: #{tpu_custom_call.1} parent=1 // pred_region
      _
    $region25: #{tpu_custom_call.1} parent=1 // pred_fallthru
      _
    // Predicated region
    $region26: #{tpu_custom_call.1} parent=1 // pred_check
      _
    $region27: #{tpu_custom_call.1} parent=1 // pred_check_branch
      %121 = sbr.rel (0) target = $region29
    $region28: #{tpu_custom_call.1} parent=1 // pred_region
      _
    $region29: #{tpu_custom_call.1} parent=1 // pred_fallthru
      _
    // Predicated region
    $region30: #{tpu_custom_call.1} parent=1 // pred_check
      _
    $region31: #{tpu_custom_call.1} parent=1 // pred_check_branch
      %123 = sbr.rel (0) target = $region33
    $region32: #{tpu_custom_call.1} parent=1 // pred_region
      _
    $region33: #{tpu_custom_call.1} parent=1 // pred_fallthru
      _
    // Predicated region
    $region34: #{tpu_custom_call.1} parent=1 // pred_check
      _
    $region35: #{tpu_custom_call.1} parent=1 // pred_check_branch
      %125 = sbr.rel (0) target = $region37
    $region36: #{tpu_custom_call.1} parent=1 // pred_region
      _
    $region37: #{tpu_custom_call.1} parent=1 // pred_fallthru
      _
    // Predicated region
    $region38: #{tpu_custom_call.1} parent=1 // pred_check
      _
    $region39: #{tpu_custom_call.1} parent=1 // pred_check_branch
      %127 = sbr.rel (0) target = $region41
    $region40: #{tpu_custom_call.1} parent=1 // pred_region
      _
    $region41: #{tpu_custom_call.1} parent=1 // pred_fallthru
      _
    // Predicated region
    $region42: #{tpu_custom_call.1} parent=1 // pred_check
      _
    $region43: #{tpu_custom_call.1} parent=1 // pred_check_branch
      %129 = sbr.rel (0) target = $region45
    $region44: #{tpu_custom_call.1} parent=1 // pred_region
      _
    $region45: #{tpu_custom_call.1} parent=1 // pred_fallthru
      _
    // Predicated region
    $region46: #{tpu_custom_call.1} parent=1 // pred_check
      _
    $region47: #{tpu_custom_call.1} parent=1 // pred_check_branch
      %131 = sbr.rel (0) target = $region49
    $region48: #{tpu_custom_call.1} parent=1 // pred_region
      _
    $region49: #{tpu_custom_call.1} parent=1 // pred_fallthru
      _
    // Predicated region
    $region50: #{tpu_custom_call.1} parent=1 // pred_check
      _
    $region51: #{tpu_custom_call.1} parent=1 // pred_check_branch
      %133 = sbr.rel (0) target = $region53
    $region52: #{tpu_custom_call.1} parent=1 // pred_region
      _
    $region53: #{tpu_custom_call.1} parent=1 // pred_fallthru
      _
    // Predicated region
    $region54: #{tpu_custom_call.1} parent=1 // pred_check
      _
    $region55: #{tpu_custom_call.1} parent=1 // pred_check_branch
      %135 = sbr.rel (0) target = $region57
    $region56: #{tpu_custom_call.1} parent=1 // pred_region
      _
    $region57: #{tpu_custom_call.1} parent=1 // pred_fallthru
      _
    // Predicated region
    $region58: #{tpu_custom_call.1} parent=1 // pred_check
      _
    $region59: #{tpu_custom_call.1} parent=1 // pred_check_branch
      %137 = sbr.rel (0) target = $region61
    $region60: #{tpu_custom_call.1} parent=1 // pred_region
      _
    $region61: #{tpu_custom_call.1} parent=1 // pred_fallthru
      _
    // Predicated region
    $region62: #{tpu_custom_call.1} parent=1 // pred_check
      _
    $region63: #{tpu_custom_call.1} parent=1 // pred_check_branch
      %139 = sbr.rel (0) target = $region65
    $region64: #{tpu_custom_call.1} parent=1 // pred_region
      _
    $region65: #{tpu_custom_call.1} parent=1 // pred_fallthru
      _
    // Predicated region
    $region66: #{tpu_custom_call.1} parent=1 // pred_check
      _
    $region67: #{tpu_custom_call.1} parent=1 // pred_check_branch
      %141 = sbr.rel (0) target = $region69
    $region68: #{tpu_custom_call.1} parent=1 // pred_region
      _
    $region69: #{tpu_custom_call.1} parent=1 // pred_fallthru
      _
    // Predicated region
    $region70: #{tpu_custom_call.1} parent=1 // pred_check
      _
    $region71: #{tpu_custom_call.1} parent=1 // pred_check_branch
      %143 = sbr.rel (0) target = $region73
    $region72: #{tpu_custom_call.1} parent=1 // pred_region
      _
    $region73: #{tpu_custom_call.1} parent=1 // pred_fallthru
      _
    // Predicated region
    $region74: #{tpu_custom_call.1} parent=1 // pred_check
      _
    $region75: #{tpu_custom_call.1} parent=1 // pred_check_branch
      %145 = sbr.rel (0) target = $region77
    $region76: #{tpu_custom_call.1} parent=1 // pred_region
      _
    $region77: #{tpu_custom_call.1} parent=1 // pred_fallthru
      _
    // Predicated region
    $region78: #{tpu_custom_call.1} parent=1 // pred_check
      _
    $region79: #{tpu_custom_call.1} parent=1 // pred_check_branch
      %147 = sbr.rel (0) target = $region81
    $region80: #{tpu_custom_call.1} parent=1 // pred_region
      _
    $region81: #{tpu_custom_call.1} parent=1 // pred_fallthru
      _
    // Predicated region
    $region82: #{tpu_custom_call.1} parent=1 // pred_check
      _
    $region83: #{tpu_custom_call.1} parent=1 // pred_check_branch
      %149 = sbr.rel (0) target = $region85
    $region84: #{tpu_custom_call.1} parent=1 // pred_region
      _
    $region85: #{tpu_custom_call.1} parent=1 // pred_fallthru
      _
    // Predicated region
    $region86: #{tpu_custom_call.1} parent=1 // pred_check
      _
    $region87: #{tpu_custom_call.1} parent=1 // pred_check_branch
      %151 = sbr.rel (0) target = $region89
    $region88: #{tpu_custom_call.1} parent=1 // pred_region
      %153 = vsyncadd [#allocation8], 0
      %s154 = sshll.u32 %s43, 4
      %s155 = int_to_ptr.hbm [resolvable:$true] %s154
      %s156 = sshll.u32 [#allocation9], 4
      %s157 = int_to_ptr.vmem [resolvable:$true] %s156
      %162 = dma.hbm_to_vmem [thread:$0]  %s155, 1024, %s157, [#allocation8], 128, 128, 8
    $region89: #{tpu_custom_call.1} parent=1 // pred_fallthru
      _
    // Predicated region
    $region90: #{tpu_custom_call.1} parent=1 // pred_check
      _
    $region91: #{tpu_custom_call.1} parent=1 // pred_check_branch
      %164 = sbr.rel (0) target = $region93
    $region92: #{tpu_custom_call.1} parent=1 // pred_region
      _
    $region93: #{tpu_custom_call.1} parent=1 // pred_fallthru
      _
    // Predicated region
    $region94: #{tpu_custom_call.1} parent=1 // pred_check
      _
    $region95: #{tpu_custom_call.1} parent=1 // pred_check_branch
      %166 = sbr.rel (0) target = $region97
    $region96: #{tpu_custom_call.1} parent=1 // pred_region
      _
    $region97: #{tpu_custom_call.1} parent=1 // pred_fallthru
      _
    // Predicated region
    $region98: #{tpu_custom_call.1} parent=1 // pred_check
      _
    $region99: #{tpu_custom_call.1} parent=1 // pred_check_branch
      %168 = sbr.rel (0) target = $region101
    $region100: #{tpu_custom_call.1} parent=1 // pred_region
      _
    $region101: #{tpu_custom_call.1} parent=1 // pred_fallthru
      _
    // Predicated region
    $region102: #{tpu_custom_call.1} parent=1 // pred_check
      _
    $region103: #{tpu_custom_call.1} parent=1 // pred_check_branch
      %170 = sbr.rel (0) target = $region105
    $region104: #{tpu_custom_call.1} parent=1 // pred_region
      %172 = vsyncadd [#allocation11], 0
      %s173 = sshll.u32 %s51, 4
      %s174 = int_to_ptr.hbm [resolvable:$true] %s173
      %s175 = sshll.u32 [#allocation10], 4
      %s176 = int_to_ptr.vmem [resolvable:$true] %s175
      %181 = dma.hbm_to_vmem [thread:$0]  %s174, 1024, %s176, [#allocation11], 128, 128, 8
    $region105: #{tpu_custom_call.1} parent=1 // pred_fallthru
      _
    // Predicated region
    $region106: #{tpu_custom_call.1} parent=1 // pred_check
      _
    $region107: #{tpu_custom_call.1} parent=1 // pred_check_branch
      %183 = sbr.rel (0) target = $region109
    $region108: #{tpu_custom_call.1} parent=1 // pred_region
      _
    $region109: #{tpu_custom_call.1} parent=1 // pred_fallthru
      _
    // Predicated region
    $region110: #{tpu_custom_call.1} parent=1 // pred_check
      _
    $region111: #{tpu_custom_call.1} parent=1 // pred_check_branch
      %185 = sbr.rel (0) target = $region113
    $region112: #{tpu_custom_call.1} parent=1 // pred_region
      _
    $region113: #{tpu_custom_call.1} parent=1 // pred_fallthru
      _
    // Predicated region
    $region114: #{tpu_custom_call.1} parent=1 // pred_check
      _
    $region115: #{tpu_custom_call.1} parent=1 // pred_check_branch
      %187 = sbr.rel (0) target = $region117
    $region116: #{tpu_custom_call.1} parent=1 // pred_region
      _
    $region117: #{tpu_custom_call.1} parent=1 // pred_fallthru
      _
    // Predicated region
    $region118: #{tpu_custom_call.1} parent=1 // pred_check
      _
    $region119: #{tpu_custom_call.1} parent=1 // pred_check_branch
      %189 = sbr.rel (0) target = $region121
    $region120: #{tpu_custom_call.1} parent=1 // pred_region
      _
    $region121: #{tpu_custom_call.1} parent=1 // pred_fallthru
      _
    // Predicated region
    $region122: #{tpu_custom_call.1} parent=1 // pred_check
      _
    $region123: #{tpu_custom_call.1} parent=1 // pred_check_branch
      %191 = sbr.rel (0) target = $region125
    $region124: #{tpu_custom_call.1} parent=1 // pred_region
      _
    $region125: #{tpu_custom_call.1} parent=1 // pred_fallthru
      _
    // Predicated region
    $region126: #{tpu_custom_call.1} parent=1 // pred_check
      _
    $region127: #{tpu_custom_call.1} parent=1 // pred_check_branch
      %193 = sbr.rel (0) target = $region129
    $region128: #{tpu_custom_call.1} parent=1 // pred_region
      _
    $region129: #{tpu_custom_call.1} parent=1 // pred_fallthru
      _
    // Predicated region
    $region130: #{tpu_custom_call.1} parent=1 // pred_check
      _
    $region131: #{tpu_custom_call.1} parent=1 // pred_check_branch
      %195 = sbr.rel (0) target = $region133
    $region132: #{tpu_custom_call.1} parent=1 // pred_region
      _
    $region133: #{tpu_custom_call.1} parent=1 // pred_fallthru
      _
    // Predicated region
    $region134: #{tpu_custom_call.1} parent=1 // pred_check
      _
    $region135: #{tpu_custom_call.1} parent=1 // pred_check_branch
      %197 = sbr.rel (0) target = $region137
    $region136: #{tpu_custom_call.1} parent=1 // pred_region
      %199 = dma.done [#allocation5], 512
    $region137: #{tpu_custom_call.1} parent=1 // pred_fallthru
      _
    // Predicated region
    $region138: #{tpu_custom_call.1} parent=1 // pred_check
      _
    $region139: #{tpu_custom_call.1} parent=1 // pred_check_branch
      %201 = sbr.rel (0) target = $region141
    $region140: #{tpu_custom_call.1} parent=1 // pred_region
      %203 = dma.done [#allocation8], 512
    $region141: #{tpu_custom_call.1} parent=1 // pred_fallthru
      _
    // Predicated region
    $region142: #{tpu_custom_call.1} parent=1 // pred_check
      _
    $region143: #{tpu_custom_call.1} parent=1 // pred_check_branch
      %205 = sbr.rel (0) target = $region145
    $region144: #{tpu_custom_call.1} parent=1 // pred_region
      %207 = dma.done [#allocation8], 1024
    $region145: #{tpu_custom_call.1} parent=1 // pred_fallthru
      _
    // Predicated region
    $region146: #{tpu_custom_call.1} parent=1 // pred_check
      _
    $region147: #{tpu_custom_call.1} parent=1 // pred_check_branch
      %209 = sbr.rel (0) target = $region149
    $region148: #{tpu_custom_call.1} parent=1 // pred_region
      %211 = dma.done [#allocation11], 1024
    $region149: #{tpu_custom_call.1} parent=1 // pred_fallthru
      _
    %v212 = vld [vmem:[%s1] sm:$0xff]
    %v213 = vld [vmem:[%s1 + $0x8] sm:$0xff]
    %v214 = vld [vmem:[%s1 + $0x10] sm:$0xff]
    %v215 = vld [vmem:[%s1 + $0x18] sm:$0xff]
    %v216 = vld [vmem:[%s11] sm:$0xff]
    %v217 = vld [vmem:[%s11 + $0x8] sm:$0xff]
    %v218 = vld [vmem:[%s11 + $0x10] sm:$0xff]
    %v219 = vld [vmem:[%s11 + $0x18] sm:$0xff]
    %v220 = vld [vmem:[%s11 + $0x20] sm:$0xff]
    %v221 = vld [vmem:[%s11 + $0x28] sm:$0xff]
    %v222 = vld [vmem:[%s11 + $0x30] sm:$0xff]
    %v223 = vld [vmem:[%s11 + $0x38] sm:$0xff]
    %v224 = vld [vmem:[%s11 + $0x40] sm:$0xff]
    %v225 = vld [vmem:[#allocation7] sm:$0xff]
    %v226 = vld [vmem:[#allocation7 + $0x8] sm:$0xff]
    %v227 = vld [vmem:[#allocation7 + $0x10] sm:$0xff]
    %v228 = vld [vmem:[#allocation7 + $0x18] sm:$0xff]
    %vm229 = vcmask 588800
    %v231 = vsel %vm229, %v212, 0
    %v234 = vsel %vm229, %v213, 0
    %v237 = vsel %vm229, %v214, 0
    %v240 = vsel %vm229, %v215, 0
    %242 = vmatpush.msra.mxu0 0.0
    %243 = vmatpush.msra.mxu0 0.0
    %244 = vmatpush.msra.mxu0 0.0
    %245 = vmatpush.msra.mxu0 0.0
    %246 = vmatpush.msra.mxu0 0.0
    %247 = vmatpush.msra.mxu0 0.0
    %248 = vmatpush.msra.mxu0 0.0
    %249 = vmatpush.msra.mxu0 %v224
    %250 = vmatpush.msra.mxu0 %v223
    %251 = vmatpush.msra.mxu0 %v222
    %252 = vmatpush.msra.mxu0 %v221
    %253 = vmatpush.msra.mxu0 %v220
    %254 = vmatpush.msra.mxu0 %v219
    %255 = vmatpush.msra.mxu0 %v218
    %256 = vmatpush.msra.mxu0 %v217
    %257 = vmatpush.msra.mxu0 %v216
    %258 = vmatmul.f32.gmra.mxu0 %v231
    %v259 = vpop.f32.mrf.mxu0
    %v260 = vadd.f32 %v225, %v259
    %261 = vmatmul.f32.gmra.mxu0 %v234
    %v262 = vpop.f32.mrf.mxu0
    %v263 = vadd.f32 %v226, %v262
    %264 = vmatmul.f32.gmra.mxu0 %v237
    %v265 = vpop.f32.mrf.mxu0
    %v266 = vadd.f32 %v227, %v265
    %267 = vmatmul.f32.gmra.mxu0 %v240
    %v268 = vpop.f32.mrf.mxu0
    %v269 = vadd.f32 %v228, %v268
    %270 = vdwg.mxu0
    %vm271 = vcmask 523264
    %272 = vst.msk [vmem:[#allocation12] sm:$0xff] %vm271, %v260
    %273 = vst.msk [vmem:[#allocation12 + $0x8] sm:$0xff] %vm271, %v263
    %274 = vst.msk [vmem:[#allocation12 + $0x10] sm:$0xff] %vm271, %v266
    %275 = vst.msk [vmem:[#allocation12 + $0x18] sm:$0xff] %vm271, %v269
    %v276 = vld [vmem:[#allocation4] sm:$0xff]
    %v277 = vld [vmem:[#allocation4 + $0x8] sm:$0xff]
    %v278 = vld [vmem:[#allocation4 + $0x10] sm:$0xff]
    %v279 = vld [vmem:[#allocation4 + $0x18] sm:$0xff]
    %v280 = vld [vmem:[%s5] sm:$0x1]
    %v282 = vperm.slane %v280, 0
    %v284 = vadd.f32 %v276, %v282
    %v285 = vadd.f32 %v277, %v282
    %v286 = vadd.f32 %v278, %v282
    %v287 = vadd.f32 %v279, %v282
    %v288 = vld [vmem:[%s15] sm:$0xff]
    %v289 = vld [vmem:[%s15 + $0x8] sm:$0xff]
    %v290 = vld [vmem:[%s15 + $0x10] sm:$0xff]
    %v291 = vld [vmem:[%s15 + $0x18] sm:$0xff]
    %v292 = vld [vmem:[%s15 + $0x20] sm:$0xff]
    %v293 = vld [vmem:[%s15 + $0x28] sm:$0xff]
    %v294 = vld [vmem:[%s15 + $0x30] sm:$0xff]
    %v295 = vld [vmem:[%s15 + $0x38] sm:$0xff]
    %v296 = vld [vmem:[%s15 + $0x40] sm:$0xff]
    %v297 = vld [vmem:[%s15 + $0x48] sm:$0xff]
    %v298 = vld [vmem:[%s15 + $0x50] sm:$0xff]
    %v299 = vld [vmem:[%s15 + $0x58] sm:$0xff]
    %v300 = vld [vmem:[%s15 + $0x60] sm:$0xff]
    %v301 = vld [vmem:[%s15 + $0x68] sm:$0xff]
    %v302 = vld [vmem:[%s15 + $0x70] sm:$0xff]
    %v303 = vld [vmem:[%s15 + $0x78] sm:$0xff]
    %v304 = vld [vmem:[%s17] sm:$0x3]
    %v306 = vperm.slane %v304, 0
    %v307 = vperm.slane %v304, 1
    %v311 = vsel %vm271, %v260, 0
    %v314 = vsel %vm271, %v263, 0
    %v317 = vsel %vm271, %v266, 0
    %v320 = vsel %vm271, %v269, 0
    %322 = vmatpush.msra.mxu0 0.0
    %323 = vmatpush.msra.mxu0 0.0
    %324 = vmatpush.msra.mxu0 0.0
    %325 = vmatpush.msra.mxu0 0.0
    %326 = vmatpush.msra.mxu0 0.0
    %327 = vmatpush.msra.mxu0 0.0
    %328 = vmatpush.msra.mxu0 0.0
    %329 = vmatpush.msra.mxu0 0.0
    %330 = vmatpush.msra.mxu0 %v302
    %331 = vmatpush.msra.mxu0 %v300
    %332 = vmatpush.msra.mxu0 %v298
    %333 = vmatpush.msra.mxu0 %v296
    %334 = vmatpush.msra.mxu0 %v294
    %335 = vmatpush.msra.mxu0 %v292
    %336 = vmatpush.msra.mxu0 %v290
    %337 = vmatpush.msra.mxu0 %v288
    %338 = vmatmul.f32.gmra.mxu0 %v311
    %v339 = vpop.f32.mrf.mxu0
    %v340 = vadd.f32 %v306, %v339
    %341 = vmatmul.f32.gmra.mxu0 %v314
    %v342 = vpop.f32.mrf.mxu0
    %v343 = vadd.f32 %v306, %v342
    %344 = vmatmul.f32.gmra.mxu0 %v317
    %v345 = vpop.f32.mrf.mxu0
    %v346 = vadd.f32 %v306, %v345
    %347 = vmatmul.f32.gmra.mxu0 %v320
    %v348 = vpop.f32.mrf.mxu0
    %v349 = vadd.f32 %v306, %v348
    %350 = vdwg.mxu0
    %351 = vmatpush.msra.mxu0 0.0
    %352 = vmatpush.msra.mxu0 0.0
    %353 = vmatpush.msra.mxu0 0.0
    %354 = vmatpush.msra.mxu0 0.0
    %355 = vmatpush.msra.mxu0 0.0
    %356 = vmatpush.msra.mxu0 0.0
    %357 = vmatpush.msra.mxu0 0.0
    %358 = vmatpush.msra.mxu0 0.0
    %359 = vmatpush.msra.mxu0 %v303
    %360 = vmatpush.msra.mxu0 %v301
    %361 = vmatpush.msra.mxu0 %v299
    %362 = vmatpush.msra.mxu0 %v297
    %363 = vmatpush.msra.mxu0 %v295
    %364 = vmatpush.msra.mxu0 %v293
    %365 = vmatpush.msra.mxu0 %v291
    %366 = vmatpush.msra.mxu0 %v289
    %367 = vmatmul.f32.gmra.mxu0 %v311
    %v368 = vpop.f32.mrf.mxu0
    %v369 = vadd.f32 %v307, %v368
    %370 = vmatmul.f32.gmra.mxu0 %v314
    %v371 = vpop.f32.mrf.mxu0
    %v372 = vadd.f32 %v307, %v371
    %373 = vmatmul.f32.gmra.mxu0 %v317
    %v374 = vpop.f32.mrf.mxu0
    %v375 = vadd.f32 %v307, %v374
    %376 = vmatmul.f32.gmra.mxu0 %v320
    %v377 = vpop.f32.mrf.mxu0
    %v378 = vadd.f32 %v307, %v377
    %379 = vdwg.mxu0
    %384 = vrot.lane.b32.xlu0 %v340, 64
    %v385 = vpop.permute.xlu0 %384
    %386 = vrot.lane.b32.xlu0 %v343, 64
    %v387 = vpop.permute.xlu0 %386
    %388 = vrot.lane.b32.xlu0 %v346, 64
    %v389 = vpop.permute.xlu0 %388
    %390 = vrot.lane.b32.xlu0 %v349, 64
    %v391 = vpop.permute.xlu0 %390
    %vm392 = vcmask 261120
    %v393 = vsel %vm392, %v340, 0
    %v395 = vsel %vm392, %v343, 0
    %v397 = vsel %vm392, %v346, 0
    %v399 = vsel %vm392, %v349, 0
    %v401 = vsel %vm392, %v385, 0
    %v403 = vsel %vm392, %v387, 0
    %v405 = vsel %vm392, %v389, 0
    %v407 = vsel %vm392, %v391, 0
    %409 = vmatpush.xpose.msra.mxu0 0.0
    %410 = vmatpush.xpose.msra.mxu0 0.0
    %411 = vmatpush.xpose.msra.mxu0 0.0
    %412 = vmatpush.xpose.msra.mxu0 0.0
    %413 = vmatpush.xpose.msra.mxu0 0.0
    %414 = vmatpush.xpose.msra.mxu0 0.0
    %415 = vmatpush.xpose.msra.mxu0 0.0
    %416 = vmatpush.xpose.msra.mxu0 0.0
    %417 = vmatpush.xpose.msra.mxu0 0.0
    %418 = vmatpush.xpose.msra.mxu0 0.0
    %419 = vmatpush.xpose.msra.mxu0 0.0
    %420 = vmatpush.xpose.msra.mxu0 0.0
    %421 = vmatpush.xpose.msra.mxu0 %v407
    %422 = vmatpush.xpose.msra.mxu0 %v405
    %423 = vmatpush.xpose.msra.mxu0 %v403
    %424 = vmatpush.xpose.msra.mxu0 %v401
    %425 = vmatmul.f32.gmra.mxu0 %v393
    %v426 = vpop.f32.mrf.mxu0
    %v427 = vadd.f32 0.0, %v426
    %428 = vmatmul.f32.gmra.mxu0 %v395
    %v429 = vpop.f32.mrf.mxu0
    %v430 = vadd.f32 0.0, %v429
    %431 = vmatmul.f32.gmra.mxu0 %v397
    %v432 = vpop.f32.mrf.mxu0
    %v433 = vadd.f32 0.0, %v432
    %434 = vmatmul.f32.gmra.mxu0 %v399
    %v435 = vpop.f32.mrf.mxu0
    %v436 = vadd.f32 0.0, %v435
    %437 = vdwg.mxu0
    %v438 = vmul.f32 %v427, 0.17677669
    %v439 = vmul.f32 %v430, 0.17677669
    %v440 = vmul.f32 %v433, 0.17677669
    %v441 = vmul.f32 %v436, 0.17677669
    %v442 = vadd.f32 %v438, %v284
    %v443 = vadd.f32 %v439, %v285
    %v444 = vadd.f32 %v440, %v286
    %v445 = vadd.f32 %v441, %v287
    %v446 = vsel %vm392, %v442, -inf
    %447 = vmax.xlane.f32.xlu0 %v446
    %v448 = vpop.xlane.xlu0 %447
    %v449 = vsel %vm392, %v443, -inf
    %450 = vmax.xlane.f32.xlu0 %v449
    %v451 = vpop.xlane.xlu0 %450
    %v452 = vsel %vm392, %v444, -inf
    %453 = vmax.xlane.f32.xlu0 %v452
    %v454 = vpop.xlane.xlu0 %453
    %v455 = vsel %vm392, %v445, -inf
    %456 = vmax.xlane.f32.xlu0 %v455
    %v457 = vpop.xlane.xlu0 %456
    %v458 = vsub.f32 %v442, %v448
    %v459 = vsub.f32 %v443, %v451
    %v460 = vsub.f32 %v444, %v454
    %v461 = vsub.f32 %v445, %v457
    %v462 = vmul.f32 %v458, 1.442695
    %v463 = vpow.pop %v462
    %v464 = vmul.f32 %v459, 1.442695
    %v465 = vpow.pop %v464
    %v466 = vmul.f32 %v460, 1.442695
    %v467 = vpow.pop %v466
    %v468 = vmul.f32 %v461, 1.442695
    %v469 = vpow.pop %v468
    %v470 = vsel %vm392, %v463, 0.0
    %471 = vadd.xlane.f32.xlu0 %v470
    %v472 = vpop.xlane.xlu0 %471
    %v473 = vsel %vm392, %v465, 0.0
    %474 = vadd.xlane.f32.xlu0 %v473
    %v475 = vpop.xlane.xlu0 %474
    %v476 = vsel %vm392, %v467, 0.0
    %477 = vadd.xlane.f32.xlu0 %v476
    %v478 = vpop.xlane.xlu0 %477
    %v479 = vsel %vm392, %v469, 0.0
    %480 = vadd.xlane.f32.xlu0 %v479
    %v481 = vpop.xlane.xlu0 %480
    %v482 = vrcp.pop %v472
    %v483 = vrcp.pop %v475
    %v484 = vrcp.pop %v478
    %v485 = vrcp.pop %v481
    %v486 = vmul.f32 %v463, %v482
    %v487 = vmul.f32 %v465, %v483
    %v488 = vmul.f32 %v467, %v484
    %v489 = vmul.f32 %v469, %v485
    %v491 = vsel %vm392, %v486, 0
    %v494 = vsel %vm392, %v487, 0
    %v497 = vsel %vm392, %v488, 0
    %v500 = vsel %vm392, %v489, 0
    %502 = vmatpush.msra.mxu0 0.0
    %503 = vmatpush.msra.mxu0 0.0
    %504 = vmatpush.msra.mxu0 0.0
    %505 = vmatpush.msra.mxu0 0.0
    %506 = vmatpush.msra.mxu0 0.0
    %507 = vmatpush.msra.mxu0 0.0
    %508 = vmatpush.msra.mxu0 0.0
    %509 = vmatpush.msra.mxu0 0.0
    %510 = vmatpush.msra.mxu0 0.0
    %511 = vmatpush.msra.mxu0 0.0
    %512 = vmatpush.msra.mxu0 0.0
    %513 = vmatpush.msra.mxu0 0.0
    %514 = vmatpush.msra.mxu0 %v378
    %515 = vmatpush.msra.mxu0 %v375
    %516 = vmatpush.msra.mxu0 %v372
    %517 = vmatpush.msra.mxu0 %v369
    %518 = vmatmul.f32.gmra.mxu0 %v491
    %v519 = vpop.f32.mrf.mxu0
    %v520 = vadd.f32 0.0, %v519
    %521 = vmatmul.f32.gmra.mxu0 %v494
    %v522 = vpop.f32.mrf.mxu0
    %v523 = vadd.f32 0.0, %v522
    %524 = vmatmul.f32.gmra.mxu0 %v497
    %v525 = vpop.f32.mrf.mxu0
    %v526 = vadd.f32 0.0, %v525
    %527 = vmatmul.f32.gmra.mxu0 %v500
    %v528 = vpop.f32.mrf.mxu0
    %v529 = vadd.f32 0.0, %v528
    %530 = vdwg.mxu0
    %531 = vst.msk [vmem:[#allocation2] sm:$0xff] %vm392, %v520
    %532 = vst.msk [vmem:[#allocation2 + $0x8] sm:$0xff] %vm392, %v523
    %533 = vst.msk [vmem:[#allocation2 + $0x10] sm:$0xff] %vm392, %v526
    %534 = vst.msk [vmem:[#allocation2 + $0x18] sm:$0xff] %vm392, %v529
    %535 = vrot.lane.b32.xlu0 %v340, 96
    %v536 = vpop.permute.xlu0 %535
    %537 = vrot.lane.b32.xlu0 %v343, 96
    %v538 = vpop.permute.xlu0 %537
    %539 = vrot.lane.b32.xlu0 %v346, 96
    %v540 = vpop.permute.xlu0 %539
    %541 = vrot.lane.b32.xlu0 %v349, 96
    %v542 = vpop.permute.xlu0 %541
    %543 = vrot.lane.b32.xlu0 %v340, 32
    %v544 = vpop.permute.xlu0 %543
    %545 = vrot.lane.b32.xlu0 %v343, 32
    %v546 = vpop.permute.xlu0 %545
    %547 = vrot.lane.b32.xlu0 %v346, 32
    %v548 = vpop.permute.xlu0 %547
    %549 = vrot.lane.b32.xlu0 %v349, 32
    %v550 = vpop.permute.xlu0 %549
    %v551 = vsel %vm392, %v536, 0
    %v553 = vsel %vm392, %v538, 0
    %v555 = vsel %vm392, %v540, 0
    %v557 = vsel %vm392, %v542, 0
    %v559 = vsel %vm392, %v544, 0
    %v561 = vsel %vm392, %v546, 0
    %v563 = vsel %vm392, %v548, 0
    %v565 = vsel %vm392, %v550, 0
    %567 = vmatpush.xpose.msra.mxu0 0.0
    %568 = vmatpush.xpose.msra.mxu0 0.0
    %569 = vmatpush.xpose.msra.mxu0 0.0
    %570 = vmatpush.xpose.msra.mxu0 0.0
    %571 = vmatpush.xpose.msra.mxu0 0.0
    %572 = vmatpush.xpose.msra.mxu0 0.0
    %573 = vmatpush.xpose.msra.mxu0 0.0
    %574 = vmatpush.xpose.msra.mxu0 0.0
    %575 = vmatpush.xpose.msra.mxu0 0.0
    %576 = vmatpush.xpose.msra.mxu0 0.0
    %577 = vmatpush.xpose.msra.mxu0 0.0
    %578 = vmatpush.xpose.msra.mxu0 0.0
    %579 = vmatpush.xpose.msra.mxu0 %v565
    %580 = vmatpush.xpose.msra.mxu0 %v563
    %581 = vmatpush.xpose.msra.mxu0 %v561
    %582 = vmatpush.xpose.msra.mxu0 %v559
    %583 = vmatmul.f32.gmra.mxu0 %v551
    %v584 = vpop.f32.mrf.mxu0
    %v585 = vadd.f32 0.0, %v584
    %586 = vmatmul.f32.gmra.mxu0 %v553
    %v587 = vpop.f32.mrf.mxu0
    %v588 = vadd.f32 0.0, %v587
    %589 = vmatmul.f32.gmra.mxu0 %v555
    %v590 = vpop.f32.mrf.mxu0
    %v591 = vadd.f32 0.0, %v590
    %592 = vmatmul.f32.gmra.mxu0 %v557
    %v593 = vpop.f32.mrf.mxu0
    %v594 = vadd.f32 0.0, %v593
    %595 = vdwg.mxu0
    %v596 = vmul.f32 %v585, 0.17677669
    %v597 = vmul.f32 %v588, 0.17677669
    %v598 = vmul.f32 %v591, 0.17677669
    %v599 = vmul.f32 %v594, 0.17677669
    %v600 = vadd.f32 %v596, %v284
    %v601 = vadd.f32 %v597, %v285
    %v602 = vadd.f32 %v598, %v286
    %v603 = vadd.f32 %v599, %v287
    %v604 = vsel %vm392, %v600, -inf
    %605 = vmax.xlane.f32.xlu0 %v604
    %v606 = vpop.xlane.xlu0 %605
    %v607 = vsel %vm392, %v601, -inf
    %608 = vmax.xlane.f32.xlu0 %v607
    %v609 = vpop.xlane.xlu0 %608
    %v610 = vsel %vm392, %v602, -inf
    %611 = vmax.xlane.f32.xlu0 %v610
    %v612 = vpop.xlane.xlu0 %611
    %v613 = vsel %vm392, %v603, -inf
    %614 = vmax.xlane.f32.xlu0 %v613
    %v615 = vpop.xlane.xlu0 %614
    %v616 = vsub.f32 %v600, %v606
    %v617 = vsub.f32 %v601, %v609
    %v618 = vsub.f32 %v602, %v612
    %v619 = vsub.f32 %v603, %v615
    %v620 = vmul.f32 %v616, 1.442695
    %v621 = vpow.pop %v620
    %v622 = vmul.f32 %v617, 1.442695
    %v623 = vpow.pop %v622
    %v624 = vmul.f32 %v618, 1.442695
    %v625 = vpow.pop %v624
    %v626 = vmul.f32 %v619, 1.442695
    %v627 = vpow.pop %v626
    %v628 = vsel %vm392, %v621, 0.0
    %629 = vadd.xlane.f32.xlu0 %v628
    %v630 = vpop.xlane.xlu0 %629
    %v631 = vsel %vm392, %v623, 0.0
    %632 = vadd.xlane.f32.xlu0 %v631
    %v633 = vpop.xlane.xlu0 %632
    %v634 = vsel %vm392, %v625, 0.0
    %635 = vadd.xlane.f32.xlu0 %v634
    %v636 = vpop.xlane.xlu0 %635
    %v637 = vsel %vm392, %v627, 0.0
    %638 = vadd.xlane.f32.xlu0 %v637
    %v639 = vpop.xlane.xlu0 %638
    %v640 = vrcp.pop %v630
    %v641 = vrcp.pop %v633
    %v642 = vrcp.pop %v636
    %v643 = vrcp.pop %v639
    %v644 = vmul.f32 %v621, %v640
    %v645 = vmul.f32 %v623, %v641
    %v646 = vmul.f32 %v625, %v642
    %v647 = vmul.f32 %v627, %v643
    %652 = vrot.lane.b32.xlu0 %v369, 96
    %v653 = vpop.permute.xlu0 %652
    %654 = vrot.lane.b32.xlu0 %v372, 96
    %v655 = vpop.permute.xlu0 %654
    %656 = vrot.lane.b32.xlu0 %v375, 96
    %v657 = vpop.permute.xlu0 %656
    %658 = vrot.lane.b32.xlu0 %v378, 96
    %v659 = vpop.permute.xlu0 %658
    %v665 = vsel %vm392, %v644, 0
    %v668 = vsel %vm392, %v645, 0
    %v671 = vsel %vm392, %v646, 0
    %v674 = vsel %vm392, %v647, 0
    %676 = vmatpush.msra.mxu0 0.0
    %677 = vmatpush.msra.mxu0 0.0
    %678 = vmatpush.msra.mxu0 0.0
    %679 = vmatpush.msra.mxu0 0.0
    %680 = vmatpush.msra.mxu0 0.0
    %681 = vmatpush.msra.mxu0 0.0
    %682 = vmatpush.msra.mxu0 0.0
    %683 = vmatpush.msra.mxu0 0.0
    %684 = vmatpush.msra.mxu0 0.0
    %685 = vmatpush.msra.mxu0 0.0
    %686 = vmatpush.msra.mxu0 0.0
    %687 = vmatpush.msra.mxu0 0.0
    %688 = vmatpush.msra.mxu0 %v659
    %689 = vmatpush.msra.mxu0 %v657
    %690 = vmatpush.msra.mxu0 %v655
    %691 = vmatpush.msra.mxu0 %v653
    %692 = vmatmul.f32.gmra.mxu0 %v665
    %v693 = vpop.f32.mrf.mxu0
    %v694 = vadd.f32 0.0, %v693
    %695 = vmatmul.f32.gmra.mxu0 %v668
    %v696 = vpop.f32.mrf.mxu0
    %v697 = vadd.f32 0.0, %v696
    %698 = vmatmul.f32.gmra.mxu0 %v671
    %v699 = vpop.f32.mrf.mxu0
    %v700 = vadd.f32 0.0, %v699
    %701 = vmatmul.f32.gmra.mxu0 %v674
    %v702 = vpop.f32.mrf.mxu0
    %v703 = vadd.f32 0.0, %v702
    %704 = vdwg.mxu0
    %709 = vrot.lane.b32.xlu0 %v694, 32
    %v710 = vpop.permute.xlu0 %709
    %711 = vrot.lane.b32.xlu0 %v697, 32
    %v712 = vpop.permute.xlu0 %711
    %713 = vrot.lane.b32.xlu0 %v700, 32
    %v714 = vpop.permute.xlu0 %713
    %715 = vrot.lane.b32.xlu0 %v703, 32
    %v716 = vpop.permute.xlu0 %715
    %vm721 = vcmask 523520
    %722 = vst.msk [vmem:[#allocation2] sm:$0xff] %vm721, %v710
    %723 = vst.msk [vmem:[#allocation2 + $0x8] sm:$0xff] %vm721, %v712
    %724 = vst.msk [vmem:[#allocation2 + $0x10] sm:$0xff] %vm721, %v714
    %725 = vst.msk [vmem:[#allocation2 + $0x18] sm:$0xff] %vm721, %v716
    %v726 = vld [vmem:[#allocation2] sm:$0xff]
    %v727 = vld [vmem:[#allocation2 + $0x8] sm:$0xff]
    %v728 = vld [vmem:[#allocation2 + $0x10] sm:$0xff]
    %v729 = vld [vmem:[#allocation2 + $0x18] sm:$0xff]
    %v730 = vld [vmem:[%s19] sm:$0xff]
    %v731 = vld [vmem:[%s19 + $0x8] sm:$0xff]
    %v732 = vld [vmem:[%s19 + $0x10] sm:$0xff]
    %v733 = vld [vmem:[%s19 + $0x18] sm:$0xff]
    %v734 = vld [vmem:[%s19 + $0x20] sm:$0xff]
    %v735 = vld [vmem:[%s19 + $0x28] sm:$0xff]
    %v736 = vld [vmem:[%s19 + $0x30] sm:$0xff]
    %v737 = vld [vmem:[%s19 + $0x38] sm:$0xff]
    %v738 = vld [vmem:[%s21] sm:$0x1]
    %v740 = vperm.slane %v738, 0
    %v743 = vsel %vm271, %v726, 0
    %v746 = vsel %vm271, %v727, 0
    %v749 = vsel %vm271, %v728, 0
    %v752 = vsel %vm271, %v729, 0
    %754 = vmatpush.msra.mxu0 0.0
    %755 = vmatpush.msra.mxu0 0.0
    %756 = vmatpush.msra.mxu0 0.0
    %757 = vmatpush.msra.mxu0 0.0
    %758 = vmatpush.msra.mxu0 0.0
    %759 = vmatpush.msra.mxu0 0.0
    %760 = vmatpush.msra.mxu0 0.0
    %761 = vmatpush.msra.mxu0 0.0
    %762 = vmatpush.msra.mxu0 %v737
    %763 = vmatpush.msra.mxu0 %v736
    %764 = vmatpush.msra.mxu0 %v735
    %765 = vmatpush.msra.mxu0 %v734
    %766 = vmatpush.msra.mxu0 %v733
    %767 = vmatpush.msra.mxu0 %v732
    %768 = vmatpush.msra.mxu0 %v731
    %769 = vmatpush.msra.mxu0 %v730
    %770 = vmatmul.f32.gmra.mxu0 %v743
    %v771 = vpop.f32.mrf.mxu0
    %v772 = vadd.f32 %v740, %v771
    %773 = vmatmul.f32.gmra.mxu0 %v746
    %v774 = vpop.f32.mrf.mxu0
    %v775 = vadd.f32 %v740, %v774
    %776 = vmatmul.f32.gmra.mxu0 %v749
    %v777 = vpop.f32.mrf.mxu0
    %v778 = vadd.f32 %v740, %v777
    %779 = vmatmul.f32.gmra.mxu0 %v752
    %v780 = vpop.f32.mrf.mxu0
    %v781 = vadd.f32 %v740, %v780
    %782 = vdwg.mxu0
    %v783 = vadd.f32 %v260, %v772
    %v784 = vadd.f32 %v263, %v775
    %v785 = vadd.f32 %v266, %v778
    %v786 = vadd.f32 %v269, %v781
    %v787 = vld [vmem:[%s23] sm:$0x1]
    %v788 = vld [vmem:[%s25] sm:$0x1]
    %v789 = vsel %vm271, %v783, 0.0
    %790 = vadd.xlane.f32.xlu0 %v789
    %v791 = vpop.xlane.xlu0 %790
    %v792 = vsel %vm271, %v784, 0.0
    %793 = vadd.xlane.f32.xlu0 %v792
    %v794 = vpop.xlane.xlu0 %793
    %v795 = vsel %vm271, %v785, 0.0
    %796 = vadd.xlane.f32.xlu0 %v795
    %v797 = vpop.xlane.xlu0 %796
    %v798 = vsel %vm271, %v786, 0.0
    %799 = vadd.xlane.f32.xlu0 %v798
    %v800 = vpop.xlane.xlu0 %799
    %v801 = vrcp.pop 64.0
    %v802 = vmul.f32 64.0, %v801
    %v803 = vsub.f32 1.0, %v802
    %v804 = vmul.f32 %v801, %v803
    %v805 = vadd.f32 %v801, %v804
    %vm806 = vweird.f32 %v801
    %v807 = vsel %vm806, %v801, %v805
    %v808 = vmul.f32 %v791, %v807
    %v809 = vmul.f32 %v794, %v807
    %v810 = vmul.f32 %v797, %v807
    %v811 = vmul.f32 %v800, %v807
    %v812 = vsub.f32 %v783, %v808
    %v813 = vsub.f32 %v784, %v809
    %v814 = vsub.f32 %v785, %v810
    %v815 = vsub.f32 %v786, %v811
    %v816 = vmul.f32 %v812, %v812
    %v817 = vmul.f32 %v813, %v813
    %v818 = vmul.f32 %v814, %v814
    %v819 = vmul.f32 %v815, %v815
    %v820 = vsel %vm271, %v816, 0.0
    %821 = vadd.xlane.f32.xlu0 %v820
    %v822 = vpop.xlane.xlu0 %821
    %v823 = vsel %vm271, %v817, 0.0
    %824 = vadd.xlane.f32.xlu0 %v823
    %v825 = vpop.xlane.xlu0 %824
    %v826 = vsel %vm271, %v818, 0.0
    %827 = vadd.xlane.f32.xlu0 %v826
    %v828 = vpop.xlane.xlu0 %827
    %v829 = vsel %vm271, %v819, 0.0
    %830 = vadd.xlane.f32.xlu0 %v829
    %v831 = vpop.xlane.xlu0 %830
    %v832 = vmul.f32 %v822, %v807
    %v833 = vmul.f32 %v825, %v807
    %v834 = vmul.f32 %v828, %v807
    %v835 = vmul.f32 %v831, %v807
    %v836 = vadd.f32 %v832, 1e-05
    %v837 = vadd.f32 %v833, 1e-05
    %v838 = vadd.f32 %v834, 1e-05
    %v839 = vadd.f32 %v835, 1e-05
    %v840 = vrsqrt.pop %v836
    %v841 = vmul.f32 %v840, %v836
    %v842 = vmul.f32 %v841, %v840
    %v843 = vmul.f32 0.5, %v842
    %v844 = vsub.f32 1.5, %v843
    %v845 = vmul.f32 %v840, %v844
    %vm846 = vweird.f32 %v836
    %vm847 = vweird.f32 %v840
    %vm848 = vmor %vm846, %vm847
    %v849 = vsel %vm848, %v840, %v845
    %v850 = vrsqrt.pop %v837
    %v851 = vmul.f32 %v850, %v837
    %v852 = vmul.f32 %v851, %v850
    %v853 = vmul.f32 0.5, %v852
    %v854 = vsub.f32 1.5, %v853
    %v855 = vmul.f32 %v850, %v854
    %vm856 = vweird.f32 %v837
    %vm857 = vweird.f32 %v850
    %vm858 = vmor %vm856, %vm857
    %v859 = vsel %vm858, %v850, %v855
    %v860 = vrsqrt.pop %v838
    %v861 = vmul.f32 %v860, %v838
    %v862 = vmul.f32 %v861, %v860
    %v863 = vmul.f32 0.5, %v862
    %v864 = vsub.f32 1.5, %v863
    %v865 = vmul.f32 %v860, %v864
    %vm866 = vweird.f32 %v838
    %vm867 = vweird.f32 %v860
    %vm868 = vmor %vm866, %vm867
    %v869 = vsel %vm868, %v860, %v865
    %v870 = vrsqrt.pop %v839
    %v871 = vmul.f32 %v870, %v839
    %v872 = vmul.f32 %v871, %v870
    %v873 = vmul.f32 0.5, %v872
    %v874 = vsub.f32 1.5, %v873
    %v875 = vmul.f32 %v870, %v874
    %vm876 = vweird.f32 %v839
    %vm877 = vweird.f32 %v870
    %vm878 = vmor %vm876, %vm877
    %v879 = vsel %vm878, %v870, %v875
    %v880 = vmul.f32 %v812, %v849
    %v881 = vmul.f32 %v813, %v859
    %v882 = vmul.f32 %v814, %v869
    %v883 = vmul.f32 %v815, %v879
    %v885 = vperm.slane %v787, 0
    %v887 = vmul.f32 %v880, %v885
    %v888 = vmul.f32 %v881, %v885
    %v889 = vmul.f32 %v882, %v885
    %v890 = vmul.f32 %v883, %v885
    %v892 = vperm.slane %v788, 0
    %v894 = vadd.f32 %v887, %v892
    %v895 = vadd.f32 %v888, %v892
    %v896 = vadd.f32 %v889, %v892
    %v897 = vadd.f32 %v890, %v892
    %v898 = vld [vmem:[%s27] sm:$0xff]
    %v899 = vld [vmem:[%s27 + $0x8] sm:$0xff]
    %v900 = vld [vmem:[%s27 + $0x10] sm:$0xff]
    %v901 = vld [vmem:[%s27 + $0x18] sm:$0xff]
    %v902 = vld [vmem:[%s27 + $0x20] sm:$0xff]
    %v903 = vld [vmem:[%s27 + $0x28] sm:$0xff]
    %v904 = vld [vmem:[%s27 + $0x30] sm:$0xff]
    %v905 = vld [vmem:[%s27 + $0x38] sm:$0xff]
    %v906 = vld [vmem:[%s29] sm:$0x1]
    %v908 = vperm.slane %v906, 0
    %v911 = vsel %vm271, %v894, 0
    %v914 = vsel %vm271, %v895, 0
    %v917 = vsel %vm271, %v896, 0
    %v920 = vsel %vm271, %v897, 0
    %922 = vmatpush.msra.mxu0 0.0
    %923 = vmatpush.msra.mxu0 0.0
    %924 = vmatpush.msra.mxu0 0.0
    %925 = vmatpush.msra.mxu0 0.0
    %926 = vmatpush.msra.mxu0 0.0
    %927 = vmatpush.msra.mxu0 0.0
    %928 = vmatpush.msra.mxu0 0.0
    %929 = vmatpush.msra.mxu0 0.0
    %930 = vmatpush.msra.mxu0 %v905
    %931 = vmatpush.msra.mxu0 %v904
    %932 = vmatpush.msra.mxu0 %v903
    %933 = vmatpush.msra.mxu0 %v902
    %934 = vmatpush.msra.mxu0 %v901
    %935 = vmatpush.msra.mxu0 %v900
    %936 = vmatpush.msra.mxu0 %v899
    %937 = vmatpush.msra.mxu0 %v898
    %938 = vmatmul.f32.gmra.mxu0 %v911
    %v939 = vpop.f32.mrf.mxu0
    %v940 = vadd.f32 %v908, %v939
    %941 = vmatmul.f32.gmra.mxu0 %v914
    %v942 = vpop.f32.mrf.mxu0
    %v943 = vadd.f32 %v908, %v942
    %944 = vmatmul.f32.gmra.mxu0 %v917
    %v945 = vpop.f32.mrf.mxu0
    %v946 = vadd.f32 %v908, %v945
    %947 = vmatmul.f32.gmra.mxu0 %v920
    %v948 = vpop.f32.mrf.mxu0
    %v949 = vadd.f32 %v908, %v948
    %950 = vdwg.mxu0
    %v951 = vmax.f32 %v940, 0.0
    %v952 = vmax.f32 %v943, 0.0
    %v953 = vmax.f32 %v946, 0.0
    %v954 = vmax.f32 %v949, 0.0
    %v955 = vld [vmem:[%s31] sm:$0xff]
    %v956 = vld [vmem:[%s31 + $0x8] sm:$0xff]
    %v957 = vld [vmem:[%s31 + $0x10] sm:$0xff]
    %v958 = vld [vmem:[%s31 + $0x18] sm:$0xff]
    %v959 = vld [vmem:[%s31 + $0x20] sm:$0xff]
    %v960 = vld [vmem:[%s31 + $0x28] sm:$0xff]
    %v961 = vld [vmem:[%s31 + $0x30] sm:$0xff]
    %v962 = vld [vmem:[%s31 + $0x38] sm:$0xff]
    %v963 = vld [vmem:[%s31 + $0x40] sm:$0xff]
    %v964 = vld [vmem:[%s31 + $0x48] sm:$0xff]
    %v965 = vld [vmem:[%s31 + $0x50] sm:$0xff]
    %v966 = vld [vmem:[%s31 + $0x58] sm:$0xff]
    %v967 = vld [vmem:[%s31 + $0x60] sm:$0xff]
    %v968 = vld [vmem:[%s31 + $0x68] sm:$0xff]
    %v969 = vld [vmem:[%s31 + $0x70] sm:$0xff]
    %v970 = vld [vmem:[%s31 + $0x78] sm:$0xff]
    %v971 = vld [vmem:[%s33] sm:$0x1]
    %v973 = vperm.slane %v971, 0
    %975 = vmatpush.msra.mxu0 %v970
    %976 = vmatpush.msra.mxu0 %v969
    %977 = vmatpush.msra.mxu0 %v968
    %978 = vmatpush.msra.mxu0 %v967
    %979 = vmatpush.msra.mxu0 %v966
    %980 = vmatpush.msra.mxu0 %v965
    %981 = vmatpush.msra.mxu0 %v964
    %982 = vmatpush.msra.mxu0 %v963
    %983 = vmatpush.msra.mxu0 %v962
    %984 = vmatpush.msra.mxu0 %v961
    %985 = vmatpush.msra.mxu0 %v960
    %986 = vmatpush.msra.mxu0 %v959
    %987 = vmatpush.msra.mxu0 %v958
    %988 = vmatpush.msra.mxu0 %v957
    %989 = vmatpush.msra.mxu0 %v956
    %990 = vmatpush.msra.mxu0 %v955
    %991 = vmatmul.f32.gmra.mxu0 %v951
    %v992 = vpop.f32.mrf.mxu0
    %v993 = vadd.f32 %v973, %v992
    %994 = vmatmul.f32.gmra.mxu0 %v952
    %v995 = vpop.f32.mrf.mxu0
    %v996 = vadd.f32 %v973, %v995
    %997 = vmatmul.f32.gmra.mxu0 %v953
    %v998 = vpop.f32.mrf.mxu0
    %v999 = vadd.f32 %v973, %v998
    %1000 = vmatmul.f32.gmra.mxu0 %v954
    %v1001 = vpop.f32.mrf.mxu0
    %v1002 = vadd.f32 %v973, %v1001
    %1003 = vdwg.mxu0
    %v1004 = vadd.f32 %v894, %v993
    %v1005 = vadd.f32 %v895, %v996
    %v1006 = vadd.f32 %v896, %v999
    %v1007 = vadd.f32 %v897, %v1002
    %v1008 = vld [vmem:[%s35] sm:$0x1]
    %v1009 = vld [vmem:[%s37] sm:$0x1]
    %v1010 = vsel %vm271, %v1004, 0.0
    %1011 = vadd.xlane.f32.xlu0 %v1010
    %v1012 = vpop.xlane.xlu0 %1011
    %v1013 = vsel %vm271, %v1005, 0.0
    %1014 = vadd.xlane.f32.xlu0 %v1013
    %v1015 = vpop.xlane.xlu0 %1014
    %v1016 = vsel %vm271, %v1006, 0.0
    %1017 = vadd.xlane.f32.xlu0 %v1016
    %v1018 = vpop.xlane.xlu0 %1017
    %v1019 = vsel %vm271, %v1007, 0.0
    %1020 = vadd.xlane.f32.xlu0 %v1019
    %v1021 = vpop.xlane.xlu0 %1020
    %v1022 = vmul.f32 %v1012, %v807
    %v1023 = vmul.f32 %v1015, %v807
    %v1024 = vmul.f32 %v1018, %v807
    %v1025 = vmul.f32 %v1021, %v807
    %v1026 = vsub.f32 %v1004, %v1022
    %v1027 = vsub.f32 %v1005, %v1023
    %v1028 = vsub.f32 %v1006, %v1024
    %v1029 = vsub.f32 %v1007, %v1025
    %v1030 = vmul.f32 %v1026, %v1026
    %v1031 = vmul.f32 %v1027, %v1027
    %v1032 = vmul.f32 %v1028, %v1028
    %v1033 = vmul.f32 %v1029, %v1029
    %v1034 = vsel %vm271, %v1030, 0.0
    %1035 = vadd.xlane.f32.xlu0 %v1034
    %v1036 = vpop.xlane.xlu0 %1035
    %v1037 = vsel %vm271, %v1031, 0.0
    %1038 = vadd.xlane.f32.xlu0 %v1037
    %v1039 = vpop.xlane.xlu0 %1038
    %v1040 = vsel %vm271, %v1032, 0.0
    %1041 = vadd.xlane.f32.xlu0 %v1040
    %v1042 = vpop.xlane.xlu0 %1041
    %v1043 = vsel %vm271, %v1033, 0.0
    %1044 = vadd.xlane.f32.xlu0 %v1043
    %v1045 = vpop.xlane.xlu0 %1044
    %v1046 = vmul.f32 %v1036, %v807
    %v1047 = vmul.f32 %v1039, %v807
    %v1048 = vmul.f32 %v1042, %v807
    %v1049 = vmul.f32 %v1045, %v807
    %v1050 = vadd.f32 %v1046, 1e-05
    %v1051 = vadd.f32 %v1047, 1e-05
    %v1052 = vadd.f32 %v1048, 1e-05
    %v1053 = vadd.f32 %v1049, 1e-05
    %v1054 = vrsqrt.pop %v1050
    %v1055 = vmul.f32 %v1054, %v1050
    %v1056 = vmul.f32 %v1055, %v1054
    %v1057 = vmul.f32 0.5, %v1056
    %v1058 = vsub.f32 1.5, %v1057
    %v1059 = vmul.f32 %v1054, %v1058
    %vm1060 = vweird.f32 %v1050
    %vm1061 = vweird.f32 %v1054
    %vm1062 = vmor %vm1060, %vm1061
    %v1063 = vsel %vm1062, %v1054, %v1059
    %v1064 = vrsqrt.pop %v1051
    %v1065 = vmul.f32 %v1064, %v1051
    %v1066 = vmul.f32 %v1065, %v1064
    %v1067 = vmul.f32 0.5, %v1066
    %v1068 = vsub.f32 1.5, %v1067
    %v1069 = vmul.f32 %v1064, %v1068
    %vm1070 = vweird.f32 %v1051
    %vm1071 = vweird.f32 %v1064
    %vm1072 = vmor %vm1070, %vm1071
    %v1073 = vsel %vm1072, %v1064, %v1069
    %v1074 = vrsqrt.pop %v1052
    %v1075 = vmul.f32 %v1074, %v1052
    %v1076 = vmul.f32 %v1075, %v1074
    %v1077 = vmul.f32 0.5, %v1076
    %v1078 = vsub.f32 1.5, %v1077
    %v1079 = vmul.f32 %v1074, %v1078
    %vm1080 = vweird.f32 %v1052
    %vm1081 = vweird.f32 %v1074
    %vm1082 = vmor %vm1080, %vm1081
    %v1083 = vsel %vm1082, %v1074, %v1079
    %v1084 = vrsqrt.pop %v1053
    %v1085 = vmul.f32 %v1084, %v1053
    %v1086 = vmul.f32 %v1085, %v1084
    %v1087 = vmul.f32 0.5, %v1086
    %v1088 = vsub.f32 1.5, %v1087
    %v1089 = vmul.f32 %v1084, %v1088
    %vm1090 = vweird.f32 %v1053
    %vm1091 = vweird.f32 %v1084
    %vm1092 = vmor %vm1090, %vm1091
    %v1093 = vsel %vm1092, %v1084, %v1089
    %v1094 = vmul.f32 %v1026, %v1063
    %v1095 = vmul.f32 %v1027, %v1073
    %v1096 = vmul.f32 %v1028, %v1083
    %v1097 = vmul.f32 %v1029, %v1093
    %v1099 = vperm.slane %v1008, 0
    %v1101 = vmul.f32 %v1094, %v1099
    %v1102 = vmul.f32 %v1095, %v1099
    %v1103 = vmul.f32 %v1096, %v1099
    %v1104 = vmul.f32 %v1097, %v1099
    %v1106 = vperm.slane %v1009, 0
    %v1108 = vadd.f32 %v1101, %v1106
    %v1109 = vadd.f32 %v1102, %v1106
    %v1110 = vadd.f32 %v1103, %v1106
    %v1111 = vadd.f32 %v1104, %v1106
    %1112 = vst.msk [vmem:[#allocation13] sm:$0xff] %vm271, %v1108
    %1113 = vst.msk [vmem:[#allocation13 + $0x8] sm:$0xff] %vm271, %v1109
    %1114 = vst.msk [vmem:[#allocation13 + $0x10] sm:$0xff] %vm271, %v1110
    %1115 = vst.msk [vmem:[#allocation13 + $0x18] sm:$0xff] %vm271, %v1111
    %v1116 = vld [vmem:[%s39] sm:$0xff]
    %v1117 = vld [vmem:[%s39 + $0x8] sm:$0xff]
    %v1118 = vld [vmem:[%s39 + $0x10] sm:$0xff]
    %v1119 = vld [vmem:[%s39 + $0x18] sm:$0xff]
    %v1120 = vld [vmem:[%s39 + $0x20] sm:$0xff]
    %v1121 = vld [vmem:[%s39 + $0x28] sm:$0xff]
    %v1122 = vld [vmem:[%s39 + $0x30] sm:$0xff]
    %v1123 = vld [vmem:[%s39 + $0x38] sm:$0xff]
    %v1124 = vld [vmem:[%s39 + $0x40] sm:$0xff]
    %v1125 = vld [vmem:[%s39 + $0x48] sm:$0xff]
    %v1126 = vld [vmem:[%s39 + $0x50] sm:$0xff]
    %v1127 = vld [vmem:[%s39 + $0x58] sm:$0xff]
    %v1128 = vld [vmem:[%s39 + $0x60] sm:$0xff]
    %v1129 = vld [vmem:[%s39 + $0x68] sm:$0xff]
    %v1130 = vld [vmem:[%s39 + $0x70] sm:$0xff]
    %v1131 = vld [vmem:[%s39 + $0x78] sm:$0xff]
    %v1132 = vld [vmem:[%s41] sm:$0x3]
    %v1134 = vperm.slane %v1132, 0
    %v1135 = vperm.slane %v1132, 1
    %v1139 = vsel %vm271, %v1108, 0
    %v1142 = vsel %vm271, %v1109, 0
    %v1145 = vsel %vm271, %v1110, 0
    %v1148 = vsel %vm271, %v1111, 0
    %1150 = vmatpush.msra.mxu0 0.0
    %1151 = vmatpush.msra.mxu0 0.0
    %1152 = vmatpush.msra.mxu0 0.0
    %1153 = vmatpush.msra.mxu0 0.0
    %1154 = vmatpush.msra.mxu0 0.0
    %1155 = vmatpush.msra.mxu0 0.0
    %1156 = vmatpush.msra.mxu0 0.0
    %1157 = vmatpush.msra.mxu0 0.0
    %1158 = vmatpush.msra.mxu0 %v1130
    %1159 = vmatpush.msra.mxu0 %v1128
    %1160 = vmatpush.msra.mxu0 %v1126
    %1161 = vmatpush.msra.mxu0 %v1124
    %1162 = vmatpush.msra.mxu0 %v1122
    %1163 = vmatpush.msra.mxu0 %v1120
    %1164 = vmatpush.msra.mxu0 %v1118
    %1165 = vmatpush.msra.mxu0 %v1116
    %1166 = vmatmul.f32.gmra.mxu0 %v1139
    %v1167 = vpop.f32.mrf.mxu0
    %v1168 = vadd.f32 %v1134, %v1167
    %1169 = vmatmul.f32.gmra.mxu0 %v1142
    %v1170 = vpop.f32.mrf.mxu0
    %v1171 = vadd.f32 %v1134, %v1170
    %1172 = vmatmul.f32.gmra.mxu0 %v1145
    %v1173 = vpop.f32.mrf.mxu0
    %v1174 = vadd.f32 %v1134, %v1173
    %1175 = vmatmul.f32.gmra.mxu0 %v1148
    %v1176 = vpop.f32.mrf.mxu0
    %v1177 = vadd.f32 %v1134, %v1176
    %1178 = vdwg.mxu0
    %1179 = vmatpush.msra.mxu0 0.0
    %1180 = vmatpush.msra.mxu0 0.0
    %1181 = vmatpush.msra.mxu0 0.0
    %1182 = vmatpush.msra.mxu0 0.0
    %1183 = vmatpush.msra.mxu0 0.0
    %1184 = vmatpush.msra.mxu0 0.0
    %1185 = vmatpush.msra.mxu0 0.0
    %1186 = vmatpush.msra.mxu0 0.0
    %1187 = vmatpush.msra.mxu0 %v1131
    %1188 = vmatpush.msra.mxu0 %v1129
    %1189 = vmatpush.msra.mxu0 %v1127
    %1190 = vmatpush.msra.mxu0 %v1125
    %1191 = vmatpush.msra.mxu0 %v1123
    %1192 = vmatpush.msra.mxu0 %v1121
    %1193 = vmatpush.msra.mxu0 %v1119
    %1194 = vmatpush.msra.mxu0 %v1117
    %1195 = vmatmul.f32.gmra.mxu0 %v1139
    %v1196 = vpop.f32.mrf.mxu0
    %v1197 = vadd.f32 %v1135, %v1196
    %1198 = vmatmul.f32.gmra.mxu0 %v1142
    %v1199 = vpop.f32.mrf.mxu0
    %v1200 = vadd.f32 %v1135, %v1199
    %1201 = vmatmul.f32.gmra.mxu0 %v1145
    %v1202 = vpop.f32.mrf.mxu0
    %v1203 = vadd.f32 %v1135, %v1202
    %1204 = vmatmul.f32.gmra.mxu0 %v1148
    %v1205 = vpop.f32.mrf.mxu0
    %v1206 = vadd.f32 %v1135, %v1205
    %1207 = vdwg.mxu0
    %1212 = vrot.lane.b32.xlu0 %v1168, 64
    %v1213 = vpop.permute.xlu0 %1212
    %1214 = vrot.lane.b32.xlu0 %v1171, 64
    %v1215 = vpop.permute.xlu0 %1214
    %1216 = vrot.lane.b32.xlu0 %v1174, 64
    %v1217 = vpop.permute.xlu0 %1216
    %1218 = vrot.lane.b32.xlu0 %v1177, 64
    %v1219 = vpop.permute.xlu0 %1218
    %v1220 = vsel %vm392, %v1168, 0
    %v1222 = vsel %vm392, %v1171, 0
    %v1224 = vsel %vm392, %v1174, 0
    %v1226 = vsel %vm392, %v1177, 0
    %v1228 = vsel %vm392, %v1213, 0
    %v1230 = vsel %vm392, %v1215, 0
    %v1232 = vsel %vm392, %v1217, 0
    %v1234 = vsel %vm392, %v1219, 0
    %1236 = vmatpush.xpose.msra.mxu0 0.0
    %1237 = vmatpush.xpose.msra.mxu0 0.0
    %1238 = vmatpush.xpose.msra.mxu0 0.0
    %1239 = vmatpush.xpose.msra.mxu0 0.0
    %1240 = vmatpush.xpose.msra.mxu0 0.0
    %1241 = vmatpush.xpose.msra.mxu0 0.0
    %1242 = vmatpush.xpose.msra.mxu0 0.0
    %1243 = vmatpush.xpose.msra.mxu0 0.0
    %1244 = vmatpush.xpose.msra.mxu0 0.0
    %1245 = vmatpush.xpose.msra.mxu0 0.0
    %1246 = vmatpush.xpose.msra.mxu0 0.0
    %1247 = vmatpush.xpose.msra.mxu0 0.0
    %1248 = vmatpush.xpose.msra.mxu0 %v1234
    %1249 = vmatpush.xpose.msra.mxu0 %v1232
    %1250 = vmatpush.xpose.msra.mxu0 %v1230
    %1251 = vmatpush.xpose.msra.mxu0 %v1228
    %1252 = vmatmul.f32.gmra.mxu0 %v1220
    %v1253 = vpop.f32.mrf.mxu0
    %v1254 = vadd.f32 0.0, %v1253
    %1255 = vmatmul.f32.gmra.mxu0 %v1222
    %v1256 = vpop.f32.mrf.mxu0
    %v1257 = vadd.f32 0.0, %v1256
    %1258 = vmatmul.f32.gmra.mxu0 %v1224
    %v1259 = vpop.f32.mrf.mxu0
    %v1260 = vadd.f32 0.0, %v1259
    %1261 = vmatmul.f32.gmra.mxu0 %v1226
    %v1262 = vpop.f32.mrf.mxu0
    %v1263 = vadd.f32 0.0, %v1262
    %1264 = vdwg.mxu0
    %v1265 = vmul.f32 %v1254, 0.17677669
    %v1266 = vmul.f32 %v1257, 0.17677669
    %v1267 = vmul.f32 %v1260, 0.17677669
    %v1268 = vmul.f32 %v1263, 0.17677669
    %v1269 = vadd.f32 %v1265, %v284
    %v1270 = vadd.f32 %v1266, %v285
    %v1271 = vadd.f32 %v1267, %v286
    %v1272 = vadd.f32 %v1268, %v287
    %v1273 = vsel %vm392, %v1269, -inf
    %1274 = vmax.xlane.f32.xlu0 %v1273
    %v1275 = vpop.xlane.xlu0 %1274
    %v1276 = vsel %vm392, %v1270, -inf
    %1277 = vmax.xlane.f32.xlu0 %v1276
    %v1278 = vpop.xlane.xlu0 %1277
    %v1279 = vsel %vm392, %v1271, -inf
    %1280 = vmax.xlane.f32.xlu0 %v1279
    %v1281 = vpop.xlane.xlu0 %1280
    %v1282 = vsel %vm392, %v1272, -inf
    %1283 = vmax.xlane.f32.xlu0 %v1282
    %v1284 = vpop.xlane.xlu0 %1283
    %v1285 = vsub.f32 %v1269, %v1275
    %v1286 = vsub.f32 %v1270, %v1278
    %v1287 = vsub.f32 %v1271, %v1281
    %v1288 = vsub.f32 %v1272, %v1284
    %v1289 = vmul.f32 %v1285, 1.442695
    %v1290 = vpow.pop %v1289
    %v1291 = vmul.f32 %v1286, 1.442695
    %v1292 = vpow.pop %v1291
    %v1293 = vmul.f32 %v1287, 1.442695
    %v1294 = vpow.pop %v1293
    %v1295 = vmul.f32 %v1288, 1.442695
    %v1296 = vpow.pop %v1295
    %v1297 = vsel %vm392, %v1290, 0.0
    %1298 = vadd.xlane.f32.xlu0 %v1297
    %v1299 = vpop.xlane.xlu0 %1298
    %v1300 = vsel %vm392, %v1292, 0.0
    %1301 = vadd.xlane.f32.xlu0 %v1300
    %v1302 = vpop.xlane.xlu0 %1301
    %v1303 = vsel %vm392, %v1294, 0.0
    %1304 = vadd.xlane.f32.xlu0 %v1303
    %v1305 = vpop.xlane.xlu0 %1304
    %v1306 = vsel %vm392, %v1296, 0.0
    %1307 = vadd.xlane.f32.xlu0 %v1306
    %v1308 = vpop.xlane.xlu0 %1307
    %v1309 = vrcp.pop %v1299
    %v1310 = vrcp.pop %v1302
    %v1311 = vrcp.pop %v1305
    %v1312 = vrcp.pop %v1308
    %v1313 = vmul.f32 %v1290, %v1309
    %v1314 = vmul.f32 %v1292, %v1310
    %v1315 = vmul.f32 %v1294, %v1311
    %v1316 = vmul.f32 %v1296, %v1312
    %v1318 = vsel %vm392, %v1313, 0
    %v1321 = vsel %vm392, %v1314, 0
    %v1324 = vsel %vm392, %v1315, 0
    %v1327 = vsel %vm392, %v1316, 0
    %1329 = vmatpush.msra.mxu0 0.0
    %1330 = vmatpush.msra.mxu0 0.0
    %1331 = vmatpush.msra.mxu0 0.0
    %1332 = vmatpush.msra.mxu0 0.0
    %1333 = vmatpush.msra.mxu0 0.0
    %1334 = vmatpush.msra.mxu0 0.0
    %1335 = vmatpush.msra.mxu0 0.0
    %1336 = vmatpush.msra.mxu0 0.0
    %1337 = vmatpush.msra.mxu0 0.0
    %1338 = vmatpush.msra.mxu0 0.0
    %1339 = vmatpush.msra.mxu0 0.0
    %1340 = vmatpush.msra.mxu0 0.0
    %1341 = vmatpush.msra.mxu0 %v1206
    %1342 = vmatpush.msra.mxu0 %v1203
    %1343 = vmatpush.msra.mxu0 %v1200
    %1344 = vmatpush.msra.mxu0 %v1197
    %1345 = vmatmul.f32.gmra.mxu0 %v1318
    %v1346 = vpop.f32.mrf.mxu0
    %v1347 = vadd.f32 0.0, %v1346
    %1348 = vmatmul.f32.gmra.mxu0 %v1321
    %v1349 = vpop.f32.mrf.mxu0
    %v1350 = vadd.f32 0.0, %v1349
    %1351 = vmatmul.f32.gmra.mxu0 %v1324
    %v1352 = vpop.f32.mrf.mxu0
    %v1353 = vadd.f32 0.0, %v1352
    %1354 = vmatmul.f32.gmra.mxu0 %v1327
    %v1355 = vpop.f32.mrf.mxu0
    %v1356 = vadd.f32 0.0, %v1355
    %1357 = vdwg.mxu0
    %1358 = vst.msk [vmem:[#allocation2] sm:$0xff] %vm392, %v1347
    %1359 = vst.msk [vmem:[#allocation2 + $0x8] sm:$0xff] %vm392, %v1350
    %1360 = vst.msk [vmem:[#allocation2 + $0x10] sm:$0xff] %vm392, %v1353
    %1361 = vst.msk [vmem:[#allocation2 + $0x18] sm:$0xff] %vm392, %v1356
    %1362 = vrot.lane.b32.xlu0 %v1168, 96
    %v1363 = vpop.permute.xlu0 %1362
    %1364 = vrot.lane.b32.xlu0 %v1171, 96
    %v1365 = vpop.permute.xlu0 %1364
    %1366 = vrot.lane.b32.xlu0 %v1174, 96
    %v1367 = vpop.permute.xlu0 %1366
    %1368 = vrot.lane.b32.xlu0 %v1177, 96
    %v1369 = vpop.permute.xlu0 %1368
    %1370 = vrot.lane.b32.xlu0 %v1168, 32
    %v1371 = vpop.permute.xlu0 %1370
    %1372 = vrot.lane.b32.xlu0 %v1171, 32
    %v1373 = vpop.permute.xlu0 %1372
    %1374 = vrot.lane.b32.xlu0 %v1174, 32
    %v1375 = vpop.permute.xlu0 %1374
    %1376 = vrot.lane.b32.xlu0 %v1177, 32
    %v1377 = vpop.permute.xlu0 %1376
    %v1378 = vsel %vm392, %v1363, 0
    %v1380 = vsel %vm392, %v1365, 0
    %v1382 = vsel %vm392, %v1367, 0
    %v1384 = vsel %vm392, %v1369, 0
    %v1386 = vsel %vm392, %v1371, 0
    %v1388 = vsel %vm392, %v1373, 0
    %v1390 = vsel %vm392, %v1375, 0
    %v1392 = vsel %vm392, %v1377, 0
    %1394 = vmatpush.xpose.msra.mxu0 0.0
    %1395 = vmatpush.xpose.msra.mxu0 0.0
    %1396 = vmatpush.xpose.msra.mxu0 0.0
    %1397 = vmatpush.xpose.msra.mxu0 0.0
    %1398 = vmatpush.xpose.msra.mxu0 0.0
    %1399 = vmatpush.xpose.msra.mxu0 0.0
    %1400 = vmatpush.xpose.msra.mxu0 0.0
    %1401 = vmatpush.xpose.msra.mxu0 0.0
    %1402 = vmatpush.xpose.msra.mxu0 0.0
    %1403 = vmatpush.xpose.msra.mxu0 0.0
    %1404 = vmatpush.xpose.msra.mxu0 0.0
    %1405 = vmatpush.xpose.msra.mxu0 0.0
    %1406 = vmatpush.xpose.msra.mxu0 %v1392
    %1407 = vmatpush.xpose.msra.mxu0 %v1390
    %1408 = vmatpush.xpose.msra.mxu0 %v1388
    %1409 = vmatpush.xpose.msra.mxu0 %v1386
    %1410 = vmatmul.f32.gmra.mxu0 %v1378
    %v1411 = vpop.f32.mrf.mxu0
    %v1412 = vadd.f32 0.0, %v1411
    %1413 = vmatmul.f32.gmra.mxu0 %v1380
    %v1414 = vpop.f32.mrf.mxu0
    %v1415 = vadd.f32 0.0, %v1414
    %1416 = vmatmul.f32.gmra.mxu0 %v1382
    %v1417 = vpop.f32.mrf.mxu0
    %v1418 = vadd.f32 0.0, %v1417
    %1419 = vmatmul.f32.gmra.mxu0 %v1384
    %v1420 = vpop.f32.mrf.mxu0
    %v1421 = vadd.f32 0.0, %v1420
    %1422 = vdwg.mxu0
    %v1423 = vmul.f32 %v1412, 0.17677669
    %v1424 = vmul.f32 %v1415, 0.17677669
    %v1425 = vmul.f32 %v1418, 0.17677669
    %v1426 = vmul.f32 %v1421, 0.17677669
    %v1427 = vadd.f32 %v1423, %v284
    %v1428 = vadd.f32 %v1424, %v285
    %v1429 = vadd.f32 %v1425, %v286
    %v1430 = vadd.f32 %v1426, %v287
    %v1431 = vsel %vm392, %v1427, -inf
    %1432 = vmax.xlane.f32.xlu0 %v1431
    %v1433 = vpop.xlane.xlu0 %1432
    %v1434 = vsel %vm392, %v1428, -inf
    %1435 = vmax.xlane.f32.xlu0 %v1434
    %v1436 = vpop.xlane.xlu0 %1435
    %v1437 = vsel %vm392, %v1429, -inf
    %1438 = vmax.xlane.f32.xlu0 %v1437
    %v1439 = vpop.xlane.xlu0 %1438
    %v1440 = vsel %vm392, %v1430, -inf
    %1441 = vmax.xlane.f32.xlu0 %v1440
    %v1442 = vpop.xlane.xlu0 %1441
    %v1443 = vsub.f32 %v1427, %v1433
    %v1444 = vsub.f32 %v1428, %v1436
    %v1445 = vsub.f32 %v1429, %v1439
    %v1446 = vsub.f32 %v1430, %v1442
    %v1447 = vmul.f32 %v1443, 1.442695
    %v1448 = vpow.pop %v1447
    %v1449 = vmul.f32 %v1444, 1.442695
    %v1450 = vpow.pop %v1449
    %v1451 = vmul.f32 %v1445, 1.442695
    %v1452 = vpow.pop %v1451
    %v1453 = vmul.f32 %v1446, 1.442695
    %v1454 = vpow.pop %v1453
    %v1455 = vsel %vm392, %v1448, 0.0
    %1456 = vadd.xlane.f32.xlu0 %v1455
    %v1457 = vpop.xlane.xlu0 %1456
    %v1458 = vsel %vm392, %v1450, 0.0
    %1459 = vadd.xlane.f32.xlu0 %v1458
    %v1460 = vpop.xlane.xlu0 %1459
    %v1461 = vsel %vm392, %v1452, 0.0
    %1462 = vadd.xlane.f32.xlu0 %v1461
    %v1463 = vpop.xlane.xlu0 %1462
    %v1464 = vsel %vm392, %v1454, 0.0
    %1465 = vadd.xlane.f32.xlu0 %v1464
    %v1466 = vpop.xlane.xlu0 %1465
    %v1467 = vrcp.pop %v1457
    %v1468 = vrcp.pop %v1460
    %v1469 = vrcp.pop %v1463
    %v1470 = vrcp.pop %v1466
    %v1471 = vmul.f32 %v1448, %v1467
    %v1472 = vmul.f32 %v1450, %v1468
    %v1473 = vmul.f32 %v1452, %v1469
    %v1474 = vmul.f32 %v1454, %v1470
    %1479 = vrot.lane.b32.xlu0 %v1197, 96
    %v1480 = vpop.permute.xlu0 %1479
    %1481 = vrot.lane.b32.xlu0 %v1200, 96
    %v1482 = vpop.permute.xlu0 %1481
    %1483 = vrot.lane.b32.xlu0 %v1203, 96
    %v1484 = vpop.permute.xlu0 %1483
    %1485 = vrot.lane.b32.xlu0 %v1206, 96
    %v1486 = vpop.permute.xlu0 %1485
    %v1492 = vsel %vm392, %v1471, 0
    %v1495 = vsel %vm392, %v1472, 0
    %v1498 = vsel %vm392, %v1473, 0
    %v1501 = vsel %vm392, %v1474, 0
    %1503 = vmatpush.msra.mxu0 0.0
    %1504 = vmatpush.msra.mxu0 0.0
    %1505 = vmatpush.msra.mxu0 0.0
    %1506 = vmatpush.msra.mxu0 0.0
    %1507 = vmatpush.msra.mxu0 0.0
    %1508 = vmatpush.msra.mxu0 0.0
    %1509 = vmatpush.msra.mxu0 0.0
    %1510 = vmatpush.msra.mxu0 0.0
    %1511 = vmatpush.msra.mxu0 0.0
    %1512 = vmatpush.msra.mxu0 0.0
    %1513 = vmatpush.msra.mxu0 0.0
    %1514 = vmatpush.msra.mxu0 0.0
    %1515 = vmatpush.msra.mxu0 %v1486
    %1516 = vmatpush.msra.mxu0 %v1484
    %1517 = vmatpush.msra.mxu0 %v1482
    %1518 = vmatpush.msra.mxu0 %v1480
    %1519 = vmatmul.f32.gmra.mxu0 %v1492
    %v1520 = vpop.f32.mrf.mxu0
    %v1521 = vadd.f32 0.0, %v1520
    %1522 = vmatmul.f32.gmra.mxu0 %v1495
    %v1523 = vpop.f32.mrf.mxu0
    %v1524 = vadd.f32 0.0, %v1523
    %1525 = vmatmul.f32.gmra.mxu0 %v1498
    %v1526 = vpop.f32.mrf.mxu0
    %v1527 = vadd.f32 0.0, %v1526
    %1528 = vmatmul.f32.gmra.mxu0 %v1501
    %v1529 = vpop.f32.mrf.mxu0
    %v1530 = vadd.f32 0.0, %v1529
    %1531 = vdwg.mxu0
    %1536 = vrot.lane.b32.xlu0 %v1521, 32
    %v1537 = vpop.permute.xlu0 %1536
    %1538 = vrot.lane.b32.xlu0 %v1524, 32
    %v1539 = vpop.permute.xlu0 %1538
    %1540 = vrot.lane.b32.xlu0 %v1527, 32
    %v1541 = vpop.permute.xlu0 %1540
    %1542 = vrot.lane.b32.xlu0 %v1530, 32
    %v1543 = vpop.permute.xlu0 %1542
    %1548 = vst.msk [vmem:[#allocation2] sm:$0xff] %vm721, %v1537
    %1549 = vst.msk [vmem:[#allocation2 + $0x8] sm:$0xff] %vm721, %v1539
    %1550 = vst.msk [vmem:[#allocation2 + $0x10] sm:$0xff] %vm721, %v1541
    %1551 = vst.msk [vmem:[#allocation2 + $0x18] sm:$0xff] %vm721, %v1543
    %v1552 = vld [vmem:[#allocation2] sm:$0xff]
    %v1553 = vld [vmem:[#allocation2 + $0x8] sm:$0xff]
    %v1554 = vld [vmem:[#allocation2 + $0x10] sm:$0xff]
    %v1555 = vld [vmem:[#allocation2 + $0x18] sm:$0xff]
    %v1556 = vld [vmem:[#allocation9] sm:$0xff]
    %v1557 = vld [vmem:[#allocation9 + $0x8] sm:$0xff]
    %v1558 = vld [vmem:[#allocation9 + $0x10] sm:$0xff]
    %v1559 = vld [vmem:[#allocation9 + $0x18] sm:$0xff]
    %v1560 = vld [vmem:[#allocation9 + $0x20] sm:$0xff]
    %v1561 = vld [vmem:[#allocation9 + $0x28] sm:$0xff]
    %v1562 = vld [vmem:[#allocation9 + $0x30] sm:$0xff]
    %v1563 = vld [vmem:[#allocation9 + $0x38] sm:$0xff]
    %v1564 = vld [vmem:[%s45] sm:$0x1]
    %v1566 = vperm.slane %v1564, 0
    %v1569 = vsel %vm271, %v1552, 0
    %v1572 = vsel %vm271, %v1553, 0
    %v1575 = vsel %vm271, %v1554, 0
    %v1578 = vsel %vm271, %v1555, 0
    %1580 = vmatpush.msra.mxu0 0.0
    %1581 = vmatpush.msra.mxu0 0.0
    %1582 = vmatpush.msra.mxu0 0.0
    %1583 = vmatpush.msra.mxu0 0.0
    %1584 = vmatpush.msra.mxu0 0.0
    %1585 = vmatpush.msra.mxu0 0.0
    %1586 = vmatpush.msra.mxu0 0.0
    %1587 = vmatpush.msra.mxu0 0.0
    %1588 = vmatpush.msra.mxu0 %v1563
    %1589 = vmatpush.msra.mxu0 %v1562
    %1590 = vmatpush.msra.mxu0 %v1561
    %1591 = vmatpush.msra.mxu0 %v1560
    %1592 = vmatpush.msra.mxu0 %v1559
    %1593 = vmatpush.msra.mxu0 %v1558
    %1594 = vmatpush.msra.mxu0 %v1557
    %1595 = vmatpush.msra.mxu0 %v1556
    %1596 = vmatmul.f32.gmra.mxu0 %v1569
    %v1597 = vpop.f32.mrf.mxu0
    %v1598 = vadd.f32 %v1566, %v1597
    %1599 = vmatmul.f32.gmra.mxu0 %v1572
    %v1600 = vpop.f32.mrf.mxu0
    %v1601 = vadd.f32 %v1566, %v1600
    %1602 = vmatmul.f32.gmra.mxu0 %v1575
    %v1603 = vpop.f32.mrf.mxu0
    %v1604 = vadd.f32 %v1566, %v1603
    %1605 = vmatmul.f32.gmra.mxu0 %v1578
    %v1606 = vpop.f32.mrf.mxu0
    %v1607 = vadd.f32 %v1566, %v1606
    %1608 = vdwg.mxu0
    %v1609 = vadd.f32 %v1108, %v1598
    %v1610 = vadd.f32 %v1109, %v1601
    %v1611 = vadd.f32 %v1110, %v1604
    %v1612 = vadd.f32 %v1111, %v1607
    %v1613 = vld [vmem:[%s47] sm:$0x1]
    %v1614 = vld [vmem:[%s49] sm:$0x1]
    %v1615 = vsel %vm271, %v1609, 0.0
    %1616 = vadd.xlane.f32.xlu0 %v1615
    %v1617 = vpop.xlane.xlu0 %1616
    %v1618 = vsel %vm271, %v1610, 0.0
    %1619 = vadd.xlane.f32.xlu0 %v1618
    %v1620 = vpop.xlane.xlu0 %1619
    %v1621 = vsel %vm271, %v1611, 0.0
    %1622 = vadd.xlane.f32.xlu0 %v1621
    %v1623 = vpop.xlane.xlu0 %1622
    %v1624 = vsel %vm271, %v1612, 0.0
    %1625 = vadd.xlane.f32.xlu0 %v1624
    %v1626 = vpop.xlane.xlu0 %1625
    %v1627 = vmul.f32 %v1617, %v807
    %v1628 = vmul.f32 %v1620, %v807
    %v1629 = vmul.f32 %v1623, %v807
    %v1630 = vmul.f32 %v1626, %v807
    %v1631 = vsub.f32 %v1609, %v1627
    %v1632 = vsub.f32 %v1610, %v1628
    %v1633 = vsub.f32 %v1611, %v1629
    %v1634 = vsub.f32 %v1612, %v1630
    %v1635 = vmul.f32 %v1631, %v1631
    %v1636 = vmul.f32 %v1632, %v1632
    %v1637 = vmul.f32 %v1633, %v1633
    %v1638 = vmul.f32 %v1634, %v1634
    %v1639 = vsel %vm271, %v1635, 0.0
    %1640 = vadd.xlane.f32.xlu0 %v1639
    %v1641 = vpop.xlane.xlu0 %1640
    %v1642 = vsel %vm271, %v1636, 0.0
    %1643 = vadd.xlane.f32.xlu0 %v1642
    %v1644 = vpop.xlane.xlu0 %1643
    %v1645 = vsel %vm271, %v1637, 0.0
    %1646 = vadd.xlane.f32.xlu0 %v1645
    %v1647 = vpop.xlane.xlu0 %1646
    %v1648 = vsel %vm271, %v1638, 0.0
    %1649 = vadd.xlane.f32.xlu0 %v1648
    %v1650 = vpop.xlane.xlu0 %1649
    %v1651 = vmul.f32 %v1641, %v807
    %v1652 = vmul.f32 %v1644, %v807
    %v1653 = vmul.f32 %v1647, %v807
    %v1654 = vmul.f32 %v1650, %v807
    %v1655 = vadd.f32 %v1651, 1e-05
    %v1656 = vadd.f32 %v1652, 1e-05
    %v1657 = vadd.f32 %v1653, 1e-05
    %v1658 = vadd.f32 %v1654, 1e-05
    %v1659 = vrsqrt.pop %v1655
    %v1660 = vmul.f32 %v1659, %v1655
    %v1661 = vmul.f32 %v1660, %v1659
    %v1662 = vmul.f32 0.5, %v1661
    %v1663 = vsub.f32 1.5, %v1662
    %v1664 = vmul.f32 %v1659, %v1663
    %vm1665 = vweird.f32 %v1655
    %vm1666 = vweird.f32 %v1659
    %vm1667 = vmor %vm1665, %vm1666
    %v1668 = vsel %vm1667, %v1659, %v1664
    %v1669 = vrsqrt.pop %v1656
    %v1670 = vmul.f32 %v1669, %v1656
    %v1671 = vmul.f32 %v1670, %v1669
    %v1672 = vmul.f32 0.5, %v1671
    %v1673 = vsub.f32 1.5, %v1672
    %v1674 = vmul.f32 %v1669, %v1673
    %vm1675 = vweird.f32 %v1656
    %vm1676 = vweird.f32 %v1669
    %vm1677 = vmor %vm1675, %vm1676
    %v1678 = vsel %vm1677, %v1669, %v1674
    %v1679 = vrsqrt.pop %v1657
    %v1680 = vmul.f32 %v1679, %v1657
    %v1681 = vmul.f32 %v1680, %v1679
    %v1682 = vmul.f32 0.5, %v1681
    %v1683 = vsub.f32 1.5, %v1682
    %v1684 = vmul.f32 %v1679, %v1683
    %vm1685 = vweird.f32 %v1657
    %vm1686 = vweird.f32 %v1679
    %vm1687 = vmor %vm1685, %vm1686
    %v1688 = vsel %vm1687, %v1679, %v1684
    %v1689 = vrsqrt.pop %v1658
    %v1690 = vmul.f32 %v1689, %v1658
    %v1691 = vmul.f32 %v1690, %v1689
    %v1692 = vmul.f32 0.5, %v1691
    %v1693 = vsub.f32 1.5, %v1692
    %v1694 = vmul.f32 %v1689, %v1693
    %vm1695 = vweird.f32 %v1658
    %vm1696 = vweird.f32 %v1689
    %vm1697 = vmor %vm1695, %vm1696
    %v1698 = vsel %vm1697, %v1689, %v1694
    %v1699 = vmul.f32 %v1631, %v1668
    %v1700 = vmul.f32 %v1632, %v1678
    %v1701 = vmul.f32 %v1633, %v1688
    %v1702 = vmul.f32 %v1634, %v1698
    %v1704 = vperm.slane %v1613, 0
    %v1706 = vmul.f32 %v1699, %v1704
    %v1707 = vmul.f32 %v1700, %v1704
    %v1708 = vmul.f32 %v1701, %v1704
    %v1709 = vmul.f32 %v1702, %v1704
    %v1711 = vperm.slane %v1614, 0
    %v1713 = vadd.f32 %v1706, %v1711
    %v1714 = vadd.f32 %v1707, %v1711
    %v1715 = vadd.f32 %v1708, %v1711
    %v1716 = vadd.f32 %v1709, %v1711
    %v1717 = vld [vmem:[#allocation10] sm:$0xff]
    %v1718 = vld [vmem:[#allocation10 + $0x8] sm:$0xff]
    %v1719 = vld [vmem:[#allocation10 + $0x10] sm:$0xff]
    %v1720 = vld [vmem:[#allocation10 + $0x18] sm:$0xff]
    %v1721 = vld [vmem:[#allocation10 + $0x20] sm:$0xff]
    %v1722 = vld [vmem:[#allocation10 + $0x28] sm:$0xff]
    %v1723 = vld [vmem:[#allocation10 + $0x30] sm:$0xff]
    %v1724 = vld [vmem:[#allocation10 + $0x38] sm:$0xff]
    %v1725 = vld [vmem:[%s53] sm:$0x1]
    %v1727 = vperm.slane %v1725, 0
    %v1730 = vsel %vm271, %v1713, 0
    %v1733 = vsel %vm271, %v1714, 0
    %v1736 = vsel %vm271, %v1715, 0
    %v1739 = vsel %vm271, %v1716, 0
    %1741 = vmatpush.msra.mxu0 0.0
    %1742 = vmatpush.msra.mxu0 0.0
    %1743 = vmatpush.msra.mxu0 0.0
    %1744 = vmatpush.msra.mxu0 0.0
    %1745 = vmatpush.msra.mxu0 0.0
    %1746 = vmatpush.msra.mxu0 0.0
    %1747 = vmatpush.msra.mxu0 0.0
    %1748 = vmatpush.msra.mxu0 0.0
    %1749 = vmatpush.msra.mxu0 %v1724
    %1750 = vmatpush.msra.mxu0 %v1723
    %1751 = vmatpush.msra.mxu0 %v1722
    %1752 = vmatpush.msra.mxu0 %v1721
    %1753 = vmatpush.msra.mxu0 %v1720
    %1754 = vmatpush.msra.mxu0 %v1719
    %1755 = vmatpush.msra.mxu0 %v1718
    %1756 = vmatpush.msra.mxu0 %v1717
    %1757 = vmatmul.f32.gmra.mxu0 %v1730
    %v1758 = vpop.f32.mrf.mxu0
    %v1759 = vadd.f32 %v1727, %v1758
    %1760 = vmatmul.f32.gmra.mxu0 %v1733
    %v1761 = vpop.f32.mrf.mxu0
    %v1762 = vadd.f32 %v1727, %v1761
    %1763 = vmatmul.f32.gmra.mxu0 %v1736
    %v1764 = vpop.f32.mrf.mxu0
    %v1765 = vadd.f32 %v1727, %v1764
    %1766 = vmatmul.f32.gmra.mxu0 %v1739
    %v1767 = vpop.f32.mrf.mxu0
    %v1768 = vadd.f32 %v1727, %v1767
    %1769 = vdwg.mxu0
    %v1770 = vmax.f32 %v1759, 0.0
    %v1771 = vmax.f32 %v1762, 0.0
    %v1772 = vmax.f32 %v1765, 0.0
    %v1773 = vmax.f32 %v1768, 0.0
    %v1774 = vld [vmem:[%s55] sm:$0xff]
    %v1775 = vld [vmem:[%s55 + $0x8] sm:$0xff]
    %v1776 = vld [vmem:[%s55 + $0x10] sm:$0xff]
    %v1777 = vld [vmem:[%s55 + $0x18] sm:$0xff]
    %v1778 = vld [vmem:[%s55 + $0x20] sm:$0xff]
    %v1779 = vld [vmem:[%s55 + $0x28] sm:$0xff]
    %v1780 = vld [vmem:[%s55 + $0x30] sm:$0xff]
    %v1781 = vld [vmem:[%s55 + $0x38] sm:$0xff]
    %v1782 = vld [vmem:[%s55 + $0x40] sm:$0xff]
    %v1783 = vld [vmem:[%s55 + $0x48] sm:$0xff]
    %v1784 = vld [vmem:[%s55 + $0x50] sm:$0xff]
    %v1785 = vld [vmem:[%s55 + $0x58] sm:$0xff]
    %v1786 = vld [vmem:[%s55 + $0x60] sm:$0xff]
    %v1787 = vld [vmem:[%s55 + $0x68] sm:$0xff]
    %v1788 = vld [vmem:[%s55 + $0x70] sm:$0xff]
    %v1789 = vld [vmem:[%s55 + $0x78] sm:$0xff]
    %v1790 = vld [vmem:[%s57] sm:$0x1]
    %v1792 = vperm.slane %v1790, 0
    %1794 = vmatpush.msra.mxu0 %v1789
    %1795 = vmatpush.msra.mxu0 %v1788
    %1796 = vmatpush.msra.mxu0 %v1787
    %1797 = vmatpush.msra.mxu0 %v1786
    %1798 = vmatpush.msra.mxu0 %v1785
    %1799 = vmatpush.msra.mxu0 %v1784
    %1800 = vmatpush.msra.mxu0 %v1783
    %1801 = vmatpush.msra.mxu0 %v1782
    %1802 = vmatpush.msra.mxu0 %v1781
    %1803 = vmatpush.msra.mxu0 %v1780
    %1804 = vmatpush.msra.mxu0 %v1779
    %1805 = vmatpush.msra.mxu0 %v1778
    %1806 = vmatpush.msra.mxu0 %v1777
    %1807 = vmatpush.msra.mxu0 %v1776
    %1808 = vmatpush.msra.mxu0 %v1775
    %1809 = vmatpush.msra.mxu0 %v1774
    %1810 = vmatmul.f32.gmra.mxu0 %v1770
    %v1811 = vpop.f32.mrf.mxu0
    %v1812 = vadd.f32 %v1792, %v1811
    %1813 = vmatmul.f32.gmra.mxu0 %v1771
    %v1814 = vpop.f32.mrf.mxu0
    %v1815 = vadd.f32 %v1792, %v1814
    %1816 = vmatmul.f32.gmra.mxu0 %v1772
    %v1817 = vpop.f32.mrf.mxu0
    %v1818 = vadd.f32 %v1792, %v1817
    %1819 = vmatmul.f32.gmra.mxu0 %v1773
    %v1820 = vpop.f32.mrf.mxu0
    %v1821 = vadd.f32 %v1792, %v1820
    %1822 = vdwg.mxu0
    %v1823 = vadd.f32 %v1713, %v1812
    %v1824 = vadd.f32 %v1714, %v1815
    %v1825 = vadd.f32 %v1715, %v1818
    %v1826 = vadd.f32 %v1716, %v1821
    %v1827 = vld [vmem:[%s59] sm:$0x1]
    %v1828 = vld [vmem:[%s61] sm:$0x1]
    %v1829 = vsel %vm271, %v1823, 0.0
    %1830 = vadd.xlane.f32.xlu0 %v1829
    %v1831 = vpop.xlane.xlu0 %1830
    %v1832 = vsel %vm271, %v1824, 0.0
    %1833 = vadd.xlane.f32.xlu0 %v1832
    %v1834 = vpop.xlane.xlu0 %1833
    %v1835 = vsel %vm271, %v1825, 0.0
    %1836 = vadd.xlane.f32.xlu0 %v1835
    %v1837 = vpop.xlane.xlu0 %1836
    %v1838 = vsel %vm271, %v1826, 0.0
    %1839 = vadd.xlane.f32.xlu0 %v1838
    %v1840 = vpop.xlane.xlu0 %1839
    %v1841 = vmul.f32 %v1831, %v807
    %v1842 = vmul.f32 %v1834, %v807
    %v1843 = vmul.f32 %v1837, %v807
    %v1844 = vmul.f32 %v1840, %v807
    %v1845 = vsub.f32 %v1823, %v1841
    %v1846 = vsub.f32 %v1824, %v1842
    %v1847 = vsub.f32 %v1825, %v1843
    %v1848 = vsub.f32 %v1826, %v1844
    %v1849 = vmul.f32 %v1845, %v1845
    %v1850 = vmul.f32 %v1846, %v1846
    %v1851 = vmul.f32 %v1847, %v1847
    %v1852 = vmul.f32 %v1848, %v1848
    %v1853 = vsel %vm271, %v1849, 0.0
    %1854 = vadd.xlane.f32.xlu0 %v1853
    %v1855 = vpop.xlane.xlu0 %1854
    %v1856 = vsel %vm271, %v1850, 0.0
    %1857 = vadd.xlane.f32.xlu0 %v1856
    %v1858 = vpop.xlane.xlu0 %1857
    %v1859 = vsel %vm271, %v1851, 0.0
    %1860 = vadd.xlane.f32.xlu0 %v1859
    %v1861 = vpop.xlane.xlu0 %1860
    %v1862 = vsel %vm271, %v1852, 0.0
    %1863 = vadd.xlane.f32.xlu0 %v1862
    %v1864 = vpop.xlane.xlu0 %1863
    %v1865 = vmul.f32 %v1855, %v807
    %v1866 = vmul.f32 %v1858, %v807
    %v1867 = vmul.f32 %v1861, %v807
    %v1868 = vmul.f32 %v1864, %v807
    %v1869 = vadd.f32 %v1865, 1e-05
    %v1870 = vadd.f32 %v1866, 1e-05
    %v1871 = vadd.f32 %v1867, 1e-05
    %v1872 = vadd.f32 %v1868, 1e-05
    %v1873 = vrsqrt.pop %v1869
    %v1874 = vmul.f32 %v1873, %v1869
    %v1875 = vmul.f32 %v1874, %v1873
    %v1876 = vmul.f32 0.5, %v1875
    %v1877 = vsub.f32 1.5, %v1876
    %v1878 = vmul.f32 %v1873, %v1877
    %vm1879 = vweird.f32 %v1869
    %vm1880 = vweird.f32 %v1873
    %vm1881 = vmor %vm1879, %vm1880
    %v1882 = vsel %vm1881, %v1873, %v1878
    %v1883 = vrsqrt.pop %v1870
    %v1884 = vmul.f32 %v1883, %v1870
    %v1885 = vmul.f32 %v1884, %v1883
    %v1886 = vmul.f32 0.5, %v1885
    %v1887 = vsub.f32 1.5, %v1886
    %v1888 = vmul.f32 %v1883, %v1887
    %vm1889 = vweird.f32 %v1870
    %vm1890 = vweird.f32 %v1883
    %vm1891 = vmor %vm1889, %vm1890
    %v1892 = vsel %vm1891, %v1883, %v1888
    %v1893 = vrsqrt.pop %v1871
    %v1894 = vmul.f32 %v1893, %v1871
    %v1895 = vmul.f32 %v1894, %v1893
    %v1896 = vmul.f32 0.5, %v1895
    %v1897 = vsub.f32 1.5, %v1896
    %v1898 = vmul.f32 %v1893, %v1897
    %vm1899 = vweird.f32 %v1871
    %vm1900 = vweird.f32 %v1893
    %vm1901 = vmor %vm1899, %vm1900
    %v1902 = vsel %vm1901, %v1893, %v1898
    %v1903 = vrsqrt.pop %v1872
    %v1904 = vmul.f32 %v1903, %v1872
    %v1905 = vmul.f32 %v1904, %v1903
    %v1906 = vmul.f32 0.5, %v1905
    %v1907 = vsub.f32 1.5, %v1906
    %v1908 = vmul.f32 %v1903, %v1907
    %vm1909 = vweird.f32 %v1872
    %vm1910 = vweird.f32 %v1903
    %vm1911 = vmor %vm1909, %vm1910
    %v1912 = vsel %vm1911, %v1903, %v1908
    %v1913 = vmul.f32 %v1845, %v1882
    %v1914 = vmul.f32 %v1846, %v1892
    %v1915 = vmul.f32 %v1847, %v1902
    %v1916 = vmul.f32 %v1848, %v1912
    %v1918 = vperm.slane %v1827, 0
    %v1920 = vmul.f32 %v1913, %v1918
    %v1921 = vmul.f32 %v1914, %v1918
    %v1922 = vmul.f32 %v1915, %v1918
    %v1923 = vmul.f32 %v1916, %v1918
    %v1925 = vperm.slane %v1828, 0
    %v1927 = vadd.f32 %v1920, %v1925
    %v1928 = vadd.f32 %v1921, %v1925
    %v1929 = vadd.f32 %v1922, %v1925
    %v1930 = vadd.f32 %v1923, %v1925
    %1931 = vst.msk [vmem:[#allocation15] sm:$0xff] %vm271, %v1927
    %1932 = vst.msk [vmem:[#allocation15 + $0x8] sm:$0xff] %vm271, %v1928
    %1933 = vst.msk [vmem:[#allocation15 + $0x10] sm:$0xff] %vm271, %v1929
    %1934 = vst.msk [vmem:[#allocation15 + $0x18] sm:$0xff] %vm271, %v1930
    %v1935 = vld [vmem:[%s3] sm:$0xff]
    %v1936 = vld [vmem:[%s3 + $0x8] sm:$0xff]
    %v1937 = vld [vmem:[%s3 + $0x10] sm:$0xff]
    %v1938 = vld [vmem:[%s3 + $0x18] sm:$0xff]
    %v1939 = vld [vmem:[%s13] sm:$0x3]
    %1941 = vset.pattern.permute.xlu0 0
    %1942 = vperm.xlu0 %1941, %v1935
    %v1943 = vpop.permute.xlu0 %1942
    %1946 = vset.pattern.permute.xlu0 0
    %1947 = vperm.xlu0 %1946, %v1936
    %v1948 = vpop.permute.xlu0 %1947
    %1951 = vset.pattern.permute.xlu0 0
    %1952 = vperm.xlu0 %1951, %v1937
    %v1953 = vpop.permute.xlu0 %1952
    %1956 = vset.pattern.permute.xlu0 0
    %1957 = vperm.xlu0 %1956, %v1938
    %v1958 = vpop.permute.xlu0 %1957
    %v1960 = vmul.f32 %v1927, %v1943
    %v1961 = vmul.f32 %v1928, %v1948
    %v1962 = vmul.f32 %v1929, %v1953
    %v1963 = vmul.f32 %v1930, %v1958
    %v1965 = vsel %vm392, %v1939, 0
    %1967 = vmatpush.msra.mxu0 0.0
    %1968 = vmatpush.msra.mxu0 0.0
    %1969 = vmatpush.msra.mxu0 0.0
    %1970 = vmatpush.msra.mxu0 0.0
    %1971 = vmatpush.msra.mxu0 0.0
    %1972 = vmatpush.msra.mxu0 0.0
    %1973 = vmatpush.msra.mxu0 0.0
    %1974 = vmatpush.msra.mxu0 0.0
    %1975 = vmatpush.msra.mxu0 0.0
    %1976 = vmatpush.msra.mxu0 0.0
    %1977 = vmatpush.msra.mxu0 0.0
    %1978 = vmatpush.msra.mxu0 0.0
    %1979 = vmatpush.msra.mxu0 %v1963
    %1980 = vmatpush.msra.mxu0 %v1962
    %1981 = vmatpush.msra.mxu0 %v1961
    %1982 = vmatpush.msra.mxu0 %v1960
    %1983 = vmatmul.f32.gmra.mxu0 %v1965
    %v1984 = vpop.f32.mrf.mxu0
    %v1985 = vadd.f32 0.0, %v1984
    %1986 = vdwg.mxu0
    %1987 = vmatpush.msra.mxu0 0.0
    %1988 = vmatpush.msra.mxu0 0.0
    %1989 = vmatpush.msra.mxu0 0.0
    %1990 = vmatpush.msra.mxu0 0.0
    %1991 = vmatpush.msra.mxu0 0.0
    %1992 = vmatpush.msra.mxu0 0.0
    %1993 = vmatpush.msra.mxu0 0.0
    %1994 = vmatpush.msra.mxu0 0.0
    %1995 = vmatpush.msra.mxu0 0.0
    %1996 = vmatpush.msra.mxu0 0.0
    %1997 = vmatpush.msra.mxu0 0.0
    %1998 = vmatpush.msra.mxu0 0.0
    %1999 = vmatpush.msra.mxu0 %v1938
    %2000 = vmatpush.msra.mxu0 %v1937
    %2001 = vmatpush.msra.mxu0 %v1936
    %2002 = vmatpush.msra.mxu0 %v1935
    %2003 = vmatmul.f32.gmra.mxu0 %v1965
    %v2004 = vpop.f32.mrf.mxu0
    %v2005 = vadd.f32 0.0, %v2004
    %2006 = vdwg.mxu0
    %v2007 = vmax.f32 %v2005, 1.0
    %2009 = vset.pattern.permute.xlu0 0
    %2010 = vperm.xlu0 %2009, %v2007
    %v2011 = vpop.permute.xlu0 %2010
    %v2013 = vrcp.pop %v2011
    %v2014 = vmul.f32 %v2011, %v2013
    %v2015 = vsub.f32 1.0, %v2014
    %v2016 = vmul.f32 %v2013, %v2015
    %v2017 = vadd.f32 %v2013, %v2016
    %vm2018 = vweird.f32 %v2011
    %vm2019 = vweird.f32 %v2013
    %vm2020 = vmor %vm2018, %vm2019
    %v2021 = vsel %vm2020, %v2013, %v2017
    %v2022 = vand.u32 2147483647, %v2011
    %vm2023 = vcmp.eq.f32.partialorder %v2022, 8.507059e+37
    %v2024 = vand.u32 %v2011, 2147483648
    %v2025 = vor.u32 1.1754944e-38, %v2024
    %v2026 = vsel %vm2023, %v2025, %v2021
    %v2027 = vmul.f32 %v1985, %v2026
    %v2028 = vld [vmem:[%s63] sm:$0xff]
    %v2029 = vld [vmem:[%s63 + $0x8] sm:$0xff]
    %v2030 = vld [vmem:[%s63 + $0x10] sm:$0xff]
    %v2031 = vld [vmem:[%s63 + $0x18] sm:$0xff]
    %v2032 = vld [vmem:[%s63 + $0x20] sm:$0xff]
    %v2033 = vld [vmem:[%s63 + $0x28] sm:$0xff]
    %v2034 = vld [vmem:[%s63 + $0x30] sm:$0xff]
    %v2035 = vld [vmem:[%s63 + $0x38] sm:$0xff]
    %v2036 = vld [vmem:[#allocation3] sm:$0x1]
    %v2038 = vperm.slane %v2036, 0
    %v2041 = vsel %vm271, %v2027, 0
    %2043 = vmatpush.msra.mxu0 0.0
    %2044 = vmatpush.msra.mxu0 0.0
    %2045 = vmatpush.msra.mxu0 0.0
    %2046 = vmatpush.msra.mxu0 0.0
    %2047 = vmatpush.msra.mxu0 0.0
    %2048 = vmatpush.msra.mxu0 0.0
    %2049 = vmatpush.msra.mxu0 0.0
    %2050 = vmatpush.msra.mxu0 0.0
    %2051 = vmatpush.msra.mxu0 %v2035
    %2052 = vmatpush.msra.mxu0 %v2034
    %2053 = vmatpush.msra.mxu0 %v2033
    %2054 = vmatpush.msra.mxu0 %v2032
    %2055 = vmatpush.msra.mxu0 %v2031
    %2056 = vmatpush.msra.mxu0 %v2030
    %2057 = vmatpush.msra.mxu0 %v2029
    %2058 = vmatpush.msra.mxu0 %v2028
    %2059 = vmatmul.f32.gmra.mxu0 %v2041
    %v2060 = vpop.f32.mrf.mxu0
    %v2061 = vadd.f32 %v2038, %v2060
    %2062 = vdwg.mxu0
    %vm2063 = vcmask 1024
    %2064 = vst.msk [vmem:[%s73] sm:$0x3] %vm2063, %v2061
    // Predicated region
    $region150: #{tpu_custom_call.1} parent=1 // pred_check
      _
    $region151: #{tpu_custom_call.1} parent=1 // pred_check_branch
      %2066 = sbr.rel (0) target = $region153
    $region152: #{tpu_custom_call.1} parent=1 // pred_region
      %2068 = vsyncadd [#allocation6], 0
      %s2069 = sshll.u32 [#allocation12], 4
      %s2070 = int_to_ptr.vmem [resolvable:$true] %s2069
      %s2071 = sshll.u32 %s67, 4
      %s2072 = int_to_ptr.hbm [resolvable:$true] %s2071
      %2077 = dma.vmem_to_hbm [thread:$0]  %s2070, 512, %s2072, [#allocation6], 128, 128, 8
    $region153: #{tpu_custom_call.1} parent=1 // pred_fallthru
      _
    // Predicated region
    $region154: #{tpu_custom_call.1} parent=1 // pred_check
      _
    $region155: #{tpu_custom_call.1} parent=1 // pred_check_branch
      %2079 = sbr.rel (0) target = $region157
    $region156: #{tpu_custom_call.1} parent=1 // pred_region
      %2081 = vsyncadd [#allocation14], 0
      %s2082 = sshll.u32 [#allocation13], 4
      %s2083 = int_to_ptr.vmem [resolvable:$true] %s2082
      %s2084 = sshll.u32 %s69, 4
      %s2085 = int_to_ptr.hbm [resolvable:$true] %s2084
      %2090 = dma.vmem_to_hbm [thread:$0]  %s2083, 512, %s2085, [#allocation14], 128, 128, 8
    $region157: #{tpu_custom_call.1} parent=1 // pred_fallthru
      _
    // Predicated region
    $region158: #{tpu_custom_call.1} parent=1 // pred_check
      _
    $region159: #{tpu_custom_call.1} parent=1 // pred_check_branch
      %2092 = sbr.rel (0) target = $region161
    $region160: #{tpu_custom_call.1} parent=1 // pred_region
      %2094 = vsyncadd [#allocation14], 0
      %s2095 = sshll.u32 [#allocation15], 4
      %s2096 = int_to_ptr.vmem [resolvable:$true] %s2095
      %s2097 = sshll.u32 %s71, 4
      %s2098 = int_to_ptr.hbm [resolvable:$true] %s2097
      %2103 = dma.vmem_to_hbm [thread:$0]  %s2096, 512, %s2098, [#allocation14], 128, 128, 8
    $region161: #{tpu_custom_call.1} parent=1 // pred_fallthru
      _
    // Predicated region
    $region162: #{tpu_custom_call.1} parent=1 // pred_check
      _
    $region163: #{tpu_custom_call.1} parent=1 // pred_check_branch
      %2105 = sbr.rel (0) target = $region165
    $region164: #{tpu_custom_call.1} parent=1 // pred_region
      _
    $region165: #{tpu_custom_call.1} parent=1 // pred_fallthru
      _
    // Predicated region
    $region166: #{tpu_custom_call.1} parent=1 // pred_check
      _
    $region167: #{tpu_custom_call.1} parent=1 // pred_check_branch
      %2107 = sbr.rel (0) target = $region169
    $region168: #{tpu_custom_call.1} parent=1 // pred_region
      %2109 = dma.done [#allocation6], 512
    $region169: #{tpu_custom_call.1} parent=1 // pred_fallthru
      _
    // Predicated region
    $region170: #{tpu_custom_call.1} parent=1 // pred_check
      _
    $region171: #{tpu_custom_call.1} parent=1 // pred_check_branch
      %2111 = sbr.rel (0) target = $region173
    $region172: #{tpu_custom_call.1} parent=1 // pred_region
      %2113 = dma.done [#allocation14], 512
    $region173: #{tpu_custom_call.1} parent=1 // pred_fallthru
      _
    // Predicated region
    $region174: #{tpu_custom_call.1} parent=1 // pred_check
      _
    $region175: #{tpu_custom_call.1} parent=1 // pred_check_branch
      %2115 = sbr.rel (0) target = $region177
    $region176: #{tpu_custom_call.1} parent=1 // pred_region
      %2117 = dma.done [#allocation14], 512
    $region177: #{tpu_custom_call.1} parent=1 // pred_fallthru
      _
    // Predicated region
    $region178: #{tpu_custom_call.1} parent=1 // pred_check
      _
    $region179: #{tpu_custom_call.1} parent=1 // pred_check_branch
      %2119 = sbr.rel (0) target = $region181
    $region180: #{tpu_custom_call.1} parent=1 // pred_region
      _
    $region181: #{tpu_custom_call.1} parent=1 // pred_fallthru
      _
    %2120 = vsyncpa [#allocation5], 1
    %2121 = vsyncpa [#allocation8], 1
    %2122 = vsyncpa [#allocation11], 1
    %2123 = vsyncpa [#allocation6], 1
    %2124 = vsyncpa [#allocation14], 1

</llo_original>
